<compile_context>
chip_gen: v5e
topology: v5e:2x2
jax: 0.10.0
libtpu: 0.0.40
codegen_flags: <defaults>
</compile_context>

<pallas_src>
import functools

import jax
import jax.numpy as jnp
from jax.experimental import pallas as pl
from jax.experimental.pallas import tpu as pltpu


def _dwconv3x3_flat_kernel(x_ref, w_ref, o_ref, xpad_ref, *, H, W, PADL):
    # x_ref:    (1, CBLK, H*W)              activation block, flat spatial on lanes
    # w_ref:    (CBLK, 9)                   per-channel taps, k = kh*3 + kw
    # o_ref:    (1, CBLK, H*W)              output block
    # xpad_ref: (CBLK, PADL + H*W + PADL)   f32 scratch with lane-aligned zero halo
    HW = H * W
    cblk = o_ref.shape[1]

    # Zero only the halos; the interior copy is lane-aligned (offset PADL is a
    # multiple of 128) so it is a straight full-width store pass.
    xpad_ref[:, :PADL] = jnp.zeros((cblk, PADL), jnp.float32)
    xpad_ref[:, PADL + HW:] = jnp.zeros((cblk, PADL), jnp.float32)
    xpad_ref[:, PADL:PADL + HW] = x_ref[0].astype(jnp.float32)

    w = w_ref[...].astype(jnp.float32)  # (CBLK, 9), tiny and resident

    # Column coordinate (w) of each flat position, for the two W-boundary masks.
    wcol = jax.lax.broadcasted_iota(jnp.int32, (1, HW), 1) % W

    def slab(dh, dw):
        # value at (h + dh, w + dw); H boundary handled by the zero halo.
        start = PADL + dh * W + dw
        return xpad_ref[:, start:start + HW]

    def tapw(dh, dw):
        k = (dh + 1) * 3 + (dw + 1)
        return w[:, k:k + 1]  # (CBLK, 1) -> lane broadcast in the multiply

    # Group the 9 taps by their W offset dw: the H boundary is free (halo),
    # the W boundary needs exactly one select per non-zero dw group.
    def col(dw):
        acc = slab(-1, dw) * tapw(-1, dw)
        acc = acc + slab(0, dw) * tapw(0, dw)
        acc = acc + slab(1, dw) * tapw(1, dw)
        return acc

    out = col(0)
    out = out + jnp.where(wcol != 0, col(-1), 0.0)       # reading w-1 invalid at w == 0
    out = out + jnp.where(wcol != W - 1, col(1), 0.0)    # reading w+1 invalid at w == W-1

    o_ref[0] = out.astype(o_ref.dtype)


def depthwise_conv3x3(x_nchw, weight_oihw, *, cblk=None):
    """x_nchw: (N, C, H, W); weight_oihw: (C, 1, 3, 3). stride 1, pad 1, no bias."""
    N, C, H, W = x_nchw.shape
    assert weight_oihw.shape == (C, 1, 3, 3)

    # Channel tile: for C = 192 this picks 96 -> grid (N, 2): one block per v7x
    # TensorCore, 2 pipelined steps on v5e/v6e.  Must be a multiple of 8.
    if cblk is None:
        for cand in (96, 64, 48, 32, 24, 16, 8):
            if C % cand == 0:
                cblk = cand
                break
        else:
            cblk = C
    n_cblk = C // cblk

    HW = H * W
    PADL = ((W + 1 + 127) // 128) * 128  # lane-aligned halo >= W + 1

    # Free, contiguous reshapes (no data movement) - keeps NCHW semantics but
    # puts the flattened spatial axis on lanes.
    x_flat = x_nchw.reshape(N, C, HW)
    w_flat = weight_oihw[:, 0].reshape(C, 9).astype(jnp.float32)

    kernel = functools.partial(_dwconv3x3_flat_kernel, H=H, W=W, PADL=PADL)

    out_flat = pl.pallas_call(
        kernel,
        out_shape=jax.ShapeDtypeStruct((N, C, HW), x_nchw.dtype),
        grid_spec=pltpu.PrefetchScalarGridSpec(
            num_scalar_prefetch=0,
            grid=(N, n_cblk),
            in_specs=[
                pl.BlockSpec((1, cblk, HW), lambda n, c: (n, c, 0)),
                pl.BlockSpec((cblk, 9), lambda n, c: (c, 0)),
            ],
            out_specs=pl.BlockSpec((1, cblk, HW), lambda n, c: (n, c, 0)),
            scratch_shapes=[pltpu.VMEM((cblk, PADL + HW + PADL), jnp.float32)],
        ),
        compiler_params=pltpu.CompilerParams(
            dimension_semantics=("parallel", "parallel"),
            vmem_limit_bytes=40 * 1024 * 1024,
        ),
    )(x_flat, w_flat)

    return out_flat.reshape(N, C, H, W)


if __name__ == "__main__":
    key = jax.random.PRNGKey(0)
    kx, kw = jax.random.split(key)

    # Channels fixed at 192 by the conv definition; small spatial size for test.
    N, C, H, W = 1, 192, 16, 16
    x = jax.random.normal(kx, (N, C, H, W), dtype=jnp.float32)
    weight = jax.random.normal(kw, (C, 1, 3, 3), dtype=jnp.float32) * 0.1

    out = jax.block_until_ready(depthwise_conv3x3(x, weight))

    # Reference check with XLA's grouped conv (same semantics as the PyTorch module).
    ref = jax.lax.conv_general_dilated(
        x, weight,
        window_strides=(1, 1),
        padding=((1, 1), (1, 1)),
        dimension_numbers=("NCHW", "OIHW", "NCHW"),
        feature_group_count=C,
    )
    assert out.shape == (N, C, H, W)
    assert jnp.allclose(out, ref, atol=1e-4, rtol=1e-4)

    print("KERNEL_OK")
</pallas_src>

<mosaic_0001>
module attributes {stable_mosaic.version = 11 : i64} {
  func.func @_dwconv3x3_flat_kernel(%arg0: i32, %arg1: i32, %arg2: memref<1x96x256xf32, #tpu.memory_space<vmem>>, %arg3: memref<96x9xf32, #tpu.memory_space<vmem>>, %arg4: memref<1x96x256xf32, #tpu.memory_space<vmem>>, %arg5: memref<96x512xf32, #tpu.memory_space<vmem>>) attributes {dimension_semantics = [#tpu.dimension_semantics<parallel>, #tpu.dimension_semantics<parallel>], iteration_bounds = array<i64: 1, 2>, scalar_prefetch = 0 : i64, scratch_operands = 1 : i64, tpu.core_type = #tpu.core_type<tc>, window_params = [{transform_indices = @transform_0, window_bounds = array<i64: 1, 96, 256>}, {transform_indices = @transform_1, window_bounds = array<i64: 96, 9>}, {transform_indices = @transform_2, window_bounds = array<i64: 1, 96, 256>}]} {
    %cst = arith.constant 0.000000e+00 : f32
    %0 = vector.broadcast %cst : f32 to vector<96x128xf32>
    %c0 = arith.constant 0 : index
    %c0_0 = arith.constant 0 : index
    %1 = vector.load %arg5[%c0, %c0_0] : memref<96x512xf32, #tpu.memory_space<vmem>>, vector<96x128xf32>
    tpu.vector_store %arg5[%c0, %c0_0], %0 {strides = array<i32>} : memref<96x512xf32, #tpu.memory_space<vmem>>, vector<96x128xf32>,
    %cst_1 = arith.constant 0.000000e+00 : f32
    %2 = vector.broadcast %cst_1 : f32 to vector<96x128xf32>
    %c0_2 = arith.constant 0 : index
    %c384 = arith.constant 384 : index
    %3 = vector.load %arg5[%c0_2, %c384] : memref<96x512xf32, #tpu.memory_space<vmem>>, vector<96x128xf32>
    tpu.vector_store %arg5[%c0_2, %c384], %2 {strides = array<i32>} : memref<96x512xf32, #tpu.memory_space<vmem>>, vector<96x128xf32>,
    %c0_3 = arith.constant 0 : index
    %c0_4 = arith.constant 0 : index
    %c0_5 = arith.constant 0 : index
    %4 = vector.load %arg2[%c0_3, %c0_4, %c0_5] : memref<1x96x256xf32, #tpu.memory_space<vmem>>, vector<1x96x256xf32>
    %5 = vector.shape_cast %4 : vector<1x96x256xf32> to vector<96x256xf32>
    %c0_6 = arith.constant 0 : index
    %c128 = arith.constant 128 : index
    %6 = vector.load %arg5[%c0_6, %c128] : memref<96x512xf32, #tpu.memory_space<vmem>>, vector<96x256xf32>
    tpu.vector_store %arg5[%c0_6, %c128], %5 {strides = array<i32>} : memref<96x512xf32, #tpu.memory_space<vmem>>, vector<96x256xf32>,
    %c0_7 = arith.constant 0 : index
    %c0_8 = arith.constant 0 : index
    %7 = vector.load %arg3[%c0_7, %c0_8] : memref<96x9xf32, #tpu.memory_space<vmem>>, vector<96x9xf32>
    %8 = tpu.iota {dimensions = array<i32: 1>} : vector<1x256xi32>
    %c16_i32 = arith.constant 16 : i32
    %c0_i32 = arith.constant 0 : i32
    %9 = arith.cmpi eq, %c16_i32, %c0_i32 : i32
    %c1_i32 = arith.constant 1 : i32
    %10 = arith.select %9, %c1_i32, %c16_i32 : i32
    %11 = vector.broadcast %10 : i32 to vector<1x256xi32>
    %12 = arith.remsi %8, %11 : vector<1x256xi32>
    %c0_i32_9 = arith.constant 0 : i32
    %13 = vector.broadcast %c0_i32_9 : i32 to vector<1x256xi32>
    %14 = arith.cmpi ne, %12, %13 : vector<1x256xi32>
    %c0_i32_10 = arith.constant 0 : i32
    %15 = vector.broadcast %c0_i32_10 : i32 to vector<1x256xi32>
    %16 = arith.cmpi slt, %12, %15 : vector<1x256xi32>
    %c0_i32_11 = arith.constant 0 : i32
    %17 = arith.cmpi slt, %10, %c0_i32_11 : i32
    %18 = vector.broadcast %17 : i1 to vector<1x256xi1>
    %19 = vector.broadcast %18 : vector<1x256xi1> to vector<1x256xi1>
    %20 = arith.xori %16, %19 : vector<1x256xi1>
    %21 = arith.andi %20, %14 : vector<1x256xi1>
    %22 = vector.broadcast %10 : i32 to vector<1x256xi32>
    %23 = arith.addi %12, %22 : vector<1x256xi32>
    %24 = arith.select %21, %23, %12 : vector<1x256xi1>, vector<1x256xi32>
    %c0_12 = arith.constant 0 : index
    %c112 = arith.constant 112 : index
    %25 = vector.load %arg5[%c0_12, %c112] : memref<96x512xf32, #tpu.memory_space<vmem>>, vector<96x256xf32>
    %26 = vector.extract_strided_slice %7 {offsets = [0, 1], sizes = [96, 1], strides = [1, 1]} : vector<96x9xf32> to vector<96x1xf32>
    %27 = vector.broadcast %26 : vector<96x1xf32> to vector<96x256xf32>
    %28 = arith.mulf %25, %27 : vector<96x256xf32>
    %c0_13 = arith.constant 0 : index
    %c128_14 = arith.constant 128 : index
    %29 = vector.load %arg5[%c0_13, %c128_14] : memref<96x512xf32, #tpu.memory_space<vmem>>, vector<96x256xf32>
    %30 = vector.extract_strided_slice %7 {offsets = [0, 4], sizes = [96, 1], strides = [1, 1]} : vector<96x9xf32> to vector<96x1xf32>
    %31 = vector.broadcast %30 : vector<96x1xf32> to vector<96x256xf32>
    %32 = arith.mulf %29, %31 : vector<96x256xf32>
    %33 = arith.addf %28, %32 : vector<96x256xf32>
    %c0_15 = arith.constant 0 : index
    %c144 = arith.constant 144 : index
    %34 = vector.load %arg5[%c0_15, %c144] : memref<96x512xf32, #tpu.memory_space<vmem>>, vector<96x256xf32>
    %35 = vector.extract_strided_slice %7 {offsets = [0, 7], sizes = [96, 1], strides = [1, 1]} : vector<96x9xf32> to vector<96x1xf32>
    %36 = vector.broadcast %35 : vector<96x1xf32> to vector<96x256xf32>
    %37 = arith.mulf %34, %36 : vector<96x256xf32>
    %38 = arith.addf %33, %37 : vector<96x256xf32>
    %c0_i32_16 = arith.constant 0 : i32
    %39 = vector.broadcast %c0_i32_16 : i32 to vector<1x256xi32>
    %40 = arith.cmpi ne, %24, %39 : vector<1x256xi32>
    %c0_17 = arith.constant 0 : index
    %c111 = arith.constant 111 : index
    %41 = vector.load %arg5[%c0_17, %c111] : memref<96x512xf32, #tpu.memory_space<vmem>>, vector<96x256xf32>
    %42 = vector.extract_strided_slice %7 {offsets = [0, 0], sizes = [96, 1], strides = [1, 1]} : vector<96x9xf32> to vector<96x1xf32>
    %43 = vector.broadcast %42 : vector<96x1xf32> to vector<96x256xf32>
    %44 = arith.mulf %41, %43 : vector<96x256xf32>
    %c0_18 = arith.constant 0 : index
    %c127 = arith.constant 127 : index
    %45 = vector.load %arg5[%c0_18, %c127] : memref<96x512xf32, #tpu.memory_space<vmem>>, vector<96x256xf32>
    %46 = vector.extract_strided_slice %7 {offsets = [0, 3], sizes = [96, 1], strides = [1, 1]} : vector<96x9xf32> to vector<96x1xf32>
    %47 = vector.broadcast %46 : vector<96x1xf32> to vector<96x256xf32>
    %48 = arith.mulf %45, %47 : vector<96x256xf32>
    %49 = arith.addf %44, %48 : vector<96x256xf32>
    %c0_19 = arith.constant 0 : index
    %c143 = arith.constant 143 : index
    %50 = vector.load %arg5[%c0_19, %c143] : memref<96x512xf32, #tpu.memory_space<vmem>>, vector<96x256xf32>
    %51 = vector.extract_strided_slice %7 {offsets = [0, 6], sizes = [96, 1], strides = [1, 1]} : vector<96x9xf32> to vector<96x1xf32>
    %52 = vector.broadcast %51 : vector<96x1xf32> to vector<96x256xf32>
    %53 = arith.mulf %50, %52 : vector<96x256xf32>
    %54 = arith.addf %49, %53 : vector<96x256xf32>
    %cst_20 = arith.constant 0.000000e+00 : f32
    %55 = vector.shape_cast %40 : vector<1x256xi1> to vector<1x256xi1>
    %56 = vector.broadcast %55 : vector<1x256xi1> to vector<96x256xi1>
    %57 = vector.broadcast %cst_20 : f32 to vector<96x256xf32>
    %58 = arith.select %56, %54, %57 : vector<96x256xi1>, vector<96x256xf32>
    %59 = arith.addf %38, %58 : vector<96x256xf32>
    %c15_i32 = arith.constant 15 : i32
    %60 = vector.broadcast %c15_i32 : i32 to vector<1x256xi32>
    %61 = arith.cmpi ne, %24, %60 : vector<1x256xi32>
    %c0_21 = arith.constant 0 : index
    %c113 = arith.constant 113 : index
    %62 = vector.load %arg5[%c0_21, %c113] : memref<96x512xf32, #tpu.memory_space<vmem>>, vector<96x256xf32>
    %63 = vector.extract_strided_slice %7 {offsets = [0, 2], sizes = [96, 1], strides = [1, 1]} : vector<96x9xf32> to vector<96x1xf32>
    %64 = vector.broadcast %63 : vector<96x1xf32> to vector<96x256xf32>
    %65 = arith.mulf %62, %64 : vector<96x256xf32>
    %c0_22 = arith.constant 0 : index
    %c129 = arith.constant 129 : index
    %66 = vector.load %arg5[%c0_22, %c129] : memref<96x512xf32, #tpu.memory_space<vmem>>, vector<96x256xf32>
    %67 = vector.extract_strided_slice %7 {offsets = [0, 5], sizes = [96, 1], strides = [1, 1]} : vector<96x9xf32> to vector<96x1xf32>
    %68 = vector.broadcast %67 : vector<96x1xf32> to vector<96x256xf32>
    %69 = arith.mulf %66, %68 : vector<96x256xf32>
    %70 = arith.addf %65, %69 : vector<96x256xf32>
    %c0_23 = arith.constant 0 : index
    %c145 = arith.constant 145 : index
    %71 = vector.load %arg5[%c0_23, %c145] : memref<96x512xf32, #tpu.memory_space<vmem>>, vector<96x256xf32>
    %72 = vector.extract_strided_slice %7 {offsets = [0, 8], sizes = [96, 1], strides = [1, 1]} : vector<96x9xf32> to vector<96x1xf32>
    %73 = vector.broadcast %72 : vector<96x1xf32> to vector<96x256xf32>
    %74 = arith.mulf %71, %73 : vector<96x256xf32>
    %75 = arith.addf %70, %74 : vector<96x256xf32>
    %cst_24 = arith.constant 0.000000e+00 : f32
    %76 = vector.shape_cast %61 : vector<1x256xi1> to vector<1x256xi1>
    %77 = vector.broadcast %76 : vector<1x256xi1> to vector<96x256xi1>
    %78 = vector.broadcast %cst_24 : f32 to vector<96x256xf32>
    %79 = arith.select %77, %75, %78 : vector<96x256xi1>, vector<96x256xf32>
    %80 = arith.addf %59, %79 : vector<96x256xf32>
    %c0_25 = arith.constant 0 : index
    %c0_26 = arith.constant 0 : index
    %c0_27 = arith.constant 0 : index
    %81 = vector.load %arg4[%c0_25, %c0_26, %c0_27] : memref<1x96x256xf32, #tpu.memory_space<vmem>>, vector<1x96x256xf32>
    %82 = vector.shape_cast %81 : vector<1x96x256xf32> to vector<96x256xf32>
    %83 = vector.shape_cast %80 : vector<96x256xf32> to vector<1x96x256xf32>
    tpu.vector_store %arg4[%c0_25, %c0_26, %c0_27], %83 {strides = array<i32>} : memref<1x96x256xf32, #tpu.memory_space<vmem>>, vector<1x96x256xf32>,
    return
  }
  func.func @transform_0(%arg0: i32, %arg1: i32) -> (i32, i32, i32) {
    %c0_i32 = arith.constant 0 : i32
    %c0_i32_0 = arith.constant 0 : i32
    return %arg0, %arg1, %c0_i32 : i32, i32, i32
  }
  func.func @transform_1(%arg0: i32, %arg1: i32) -> (i32, i32) {
    %c0_i32 = arith.constant 0 : i32
    %c0_i32_0 = arith.constant 0 : i32
    return %arg1, %c0_i32 : i32, i32
  }
  func.func @transform_2(%arg0: i32, %arg1: i32) -> (i32, i32, i32) {
    %c0_i32 = arith.constant 0 : i32
    %c0_i32_0 = arith.constant 0 : i32
    return %arg0, %arg1, %c0_i32 : i32, i32, i32
  }
}

</mosaic_0001>

<llo_original>
// kernel: tpu_custom_call.1
$region0: #{tpu_custom_call.1}
  #allocation0 [shape = 'u32[]', space=smem, size = 0x4, offset = 0x4, fixed_abs, tag = 'smem constant byte address 0x4 - core index']
  #allocation1 [shape = 'u32[72,128]{1,0:T(1,128)}', space=vmem, size = 0x9000, scoped, tag = 'internal scratch']
  #allocation2 [shape = 'f32[96,512]{1,0:T(8,128)}', space=vmem, size = 0x30000, scoped, tag = 'scratch operand']
  %s0 = inlined_call_operand.hbm [shape: f32[1,192,256], index: 0, kind: input, shape index: {}]
  %s1 = inlined_call_operand.vmem [shape: f32[192,9], index: 1, kind: input, shape index: {}]
  %s2 = inlined_call_operand.hbm [shape: f32[1,192,256], index: 2, kind: output, shape index: {}]
  %s3 = sld [smem:[#allocation0]]
  $region45: #{tpu_custom_call.1} parent=0
    _
  %s5 = ssub.s32 1, %s3
  %s6 = scalar_select 0, %s5, %s3
  $region1: #{tpu_custom_call.1} parent=0
    #allocation3 [shape = 'u8[196608]{0}', space=vmem, size = 0x30000, scoped, tag = 'input window, operand 0']
    #allocation4 [shape = 's32[2]{0}', space=sflag, size = 0x8, scoped, tag = 'scoped memory for tpu_custom_call.1']
    #allocation5 [shape = 's32[2]{0}', space=sflag, size = 0x8, scoped, tag = 'scoped memory for tpu_custom_call.1']
    #allocation6 [shape = 'u8[196608]{0}', space=vmem, size = 0x30000, scoped, tag = 'output window, operand 0']
    %7 = vsyncpa [#allocation4], 0
    %s8 = scalar_lea.sflag [#allocation4], 1
    %9 = vsyncpa %s8, 0
    %10 = vsyncpa [#allocation5], 0
    %s11 = scalar_lea.sflag [#allocation5], 1
    %12 = vsyncpa %s11, 0
    loop: start=0, step=1, limit=4
    $region2: #{tpu_custom_call.1} parent=1 // loop_pre_header
      _
    $region3: #{tpu_custom_call.1} parent=1 // loop_header
      %s14 = sphi 0, %s18
      %p15 = scmp.ge.s32.totalorder %s14, 4
      %s21 = sphi 0, %s33
      %s22 = sphi 0, %s29
      %s23 = sphi 0, %s21
      %s24 = sphi 0, %s22
      %s25 = sphi 0, %s23
      %s26 = sphi 0, %s24
      %s38 = sphi 0, %s40
      %s41 = sphi 0, %s38
      %s42 = sphi 0, %s41
      %s58 = sphi 0, %s42
      %s64 = sphi 0, %s66
      %s67 = sphi 0, %s64
      %s68 = sphi 0, %s67
      %s84 = sphi 0, %s68
      %s92 = sphi 0, %s94
      %s95 = sphi 0, %s92
      %s96 = sphi 0, %s95
      %s112 = sphi 0, %s96
    $region4: #{tpu_custom_call.1} parent=1 // loop_header_branch
      %17 = sbr.rel (%p15) target = $region8
    $region5: #{tpu_custom_call.1} parent=1 // loop_body
      %s19 = ssub.s32 %s14, 1
      %s20 = ssub.s32 %s14, 2
      %s27 = sadd.s32 1, %s22
      %p28 = scmp.ge.s32.totalorder %s27, 2
      %s29 = scalar_select %p28, 0, %s27
      %s30 = sadd.s32 1, %s21
      %s31 = scalar_select %p28, %s30, %s21
      %p32 = scmp.ge.s32.totalorder %s31, 1
      %s33 = scalar_select %p32, 0, %s31
      %s34 = ssub.s32 %s21, %s33
      %s35 = ssub.s32 %s22, %s29
      %s36 = sor.u32 %s34, %s35
      %p37 = scmp.eq.s32.totalorder %s36, 0
      %s39 = sadd.s32 %s38, 1
      %s40 = scalar_select %p37, %s38, %s39
      %p43 = pneg %p37
      %p44 = scmp.eq.s32.totalorder %s14, 1
      %p45 = por %p43, %p44
      %p46 = scmp.ne.s32.totalorder %s38, %s41
      %p47 = scmp.eq.s32.totalorder %s14, 0
      %p48 = por %p46, %p47
      %p49 = scmp.ne.s32.totalorder %s38, %s41
      %p50 = scmp.eq.s32.totalorder %s19, 1
      %p51 = por %p49, %p50
      %p52 = scmp.ne.s32.totalorder %s41, %s42
      %p53 = scmp.eq.s32.totalorder %s19, 0
      %p54 = por %p52, %p53
      %p55 = scmp.ne.s32.totalorder %s41, %s42
      %p56 = scmp.eq.s32.totalorder %s20, 1
      %p57 = por %p55, %p56
      %p59 = scmp.ne.s32.totalorder %s42, %s58
      %p60 = scmp.eq.s32.totalorder %s20, 0
      %p61 = por %p59, %p60
      %s62 = ssub.s32 %s22, %s29
      %p63 = scmp.eq.s32.totalorder %s62, 0
      %s65 = sadd.s32 %s64, 1
      %s66 = scalar_select %p63, %s64, %s65
      %p69 = pneg %p63
      %p70 = scmp.eq.s32.totalorder %s14, 1
      %p71 = por %p69, %p70
      %p72 = scmp.ne.s32.totalorder %s64, %s67
      %p73 = scmp.eq.s32.totalorder %s14, 0
      %p74 = por %p72, %p73
      %p75 = scmp.ne.s32.totalorder %s64, %s67
      %p76 = scmp.eq.s32.totalorder %s19, 1
      %p77 = por %p75, %p76
      %p78 = scmp.ne.s32.totalorder %s67, %s68
      %p79 = scmp.eq.s32.totalorder %s19, 0
      %p80 = por %p78, %p79
      %p81 = scmp.ne.s32.totalorder %s67, %s68
      %p82 = scmp.eq.s32.totalorder %s20, 1
      %p83 = por %p81, %p82
      %p85 = scmp.ne.s32.totalorder %s68, %s84
      %p86 = scmp.eq.s32.totalorder %s20, 0
      %p87 = por %p85, %p86
      %s88 = ssub.s32 %s21, %s33
      %s89 = ssub.s32 %s22, %s29
      %s90 = sor.u32 %s88, %s89
      %p91 = scmp.eq.s32.totalorder %s90, 0
      %s93 = sadd.s32 %s92, 1
      %s94 = scalar_select %p91, %s92, %s93
      %p97 = pneg %p91
      %p98 = scmp.eq.s32.totalorder %s14, 1
      %p99 = por %p97, %p98
      %p100 = scmp.ne.s32.totalorder %s92, %s95
      %p101 = scmp.eq.s32.totalorder %s14, 0
      %p102 = por %p100, %p101
      %p103 = scmp.ne.s32.totalorder %s92, %s95
      %p104 = scmp.eq.s32.totalorder %s19, 1
      %p105 = por %p103, %p104
      %p106 = scmp.ne.s32.totalorder %s95, %s96
      %p107 = scmp.eq.s32.totalorder %s19, 0
      %p108 = por %p106, %p107
      %p109 = scmp.ne.s32.totalorder %s95, %s96
      %p110 = scmp.eq.s32.totalorder %s20, 1
      %p111 = por %p109, %p110
      %p113 = scmp.ne.s32.totalorder %s96, %s112
      %p114 = scmp.eq.s32.totalorder %s20, 0
      %p115 = por %p113, %p114
      %p116 = scmp.le.s32.totalorder 1, %s14
      %p117 = scmp.lt.s32.totalorder %s14, 3
      %p118 = pnand %p116, %p117
      %p119 = pneg %p118
      // Predicated region
      $region9: #{tpu_custom_call.1} parent=5 // pred_check
        _
      $region10: #{tpu_custom_call.1} parent=5 // pred_check_branch
        %121 = sbr.rel (%p118) target = $region12
      $region11: #{tpu_custom_call.1} parent=5 // pred_region
        %s122 = ssub.s32 %s14, 1
      $region12: #{tpu_custom_call.1} parent=5 // pred_fallthru
        _
      %p123 = scmp.lt.s32.totalorder %s14, 2
      // Predicated region
      $region13: #{tpu_custom_call.1} parent=5 // pred_check
        %p124 = pneg %p123
      $region14: #{tpu_custom_call.1} parent=5 // pred_check_branch
        %126 = sbr.rel (%p124) target = $region16
      $region15: #{tpu_custom_call.1} parent=5 // pred_region
        // Predicated region
        $region17: #{tpu_custom_call.1} parent=15 // pred_check
          %p127 = pneg %p48
        $region18: #{tpu_custom_call.1} parent=15 // pred_check_branch
          %129 = sbr.rel (%p127) target = $region20
        $region19: #{tpu_custom_call.1} parent=15 // pred_region
          %s130 = sand.u32 %s38, 1
          %s131 = scalar_lea.sflag [#allocation4], %s130
          %s132 = sand.u32 %s38, 1
          %s133 = smul.addr %s132, 192
          %s134 = scalar_lea.vmem [#allocation3], %s133
          %s135 = smul.u32 12, %s22
          %137 = vsyncadd %s131, 0
          %s138 = smul.addr %s135, 2
          %s139 = smul.addr %s21, 48
          %s140 = sadd.s32 %s138, %s139
          %s141 = smul.addr %s140, 8
          %s142 = scalar_lea.hbm %s0, %s141
          %s143 = sshll.u32 %s142, 4
          %s144 = int_to_ptr.hbm [resolvable:$true] %s143
          %s145 = sshll.u32 %s134, 4
          %s146 = int_to_ptr.vmem [resolvable:$true] %s145
          %151 = dma.hbm_to_vmem [thread:$0]  %s144, 3072, %s146, %s131, 256, 256, 16
        $region20: #{tpu_custom_call.1} parent=15 // pred_fallthru
          _
        // Predicated region
        $region21: #{tpu_custom_call.1} parent=15 // pred_check
          %p152 = pneg %p74
        $region22: #{tpu_custom_call.1} parent=15 // pred_check_branch
          %154 = sbr.rel (%p152) target = $region24
        $region23: #{tpu_custom_call.1} parent=15 // pred_region
          %s155 = smul.u32 12, %s22
          %p156 = scmp.lt.s32.totalorder %s155, 23
          %s157 = scalar_select %p156, %s155, 23
          %s158 = smul.addr %s157, 8
          %s159 = scalar_lea.vmem %s1, %s158
          %s160 = smul.u32 12, %s22
        $region24: #{tpu_custom_call.1} parent=15 // pred_fallthru
          _
      $region16: #{tpu_custom_call.1} parent=5 // pred_fallthru
        _
      %p161 = scmp.le.s32.totalorder 1, %s14
      %p162 = scmp.lt.s32.totalorder %s14, 3
      %p163 = pnand %p161, %p162
      %p164 = pneg %p163
      // Predicated region
      $region25: #{tpu_custom_call.1} parent=5 // pred_check
        _
      $region26: #{tpu_custom_call.1} parent=5 // pred_check_branch
        %166 = sbr.rel (%p163) target = $region28
      $region27: #{tpu_custom_call.1} parent=5 // pred_region
        %s167 = ssub.s32 %s14, 1
        %s168 = sand.u32 %s41, 1
        %s169 = scalar_lea.sflag [#allocation4], %s168
        %s170 = sand.u32 %s41, 1
        %s171 = smul.addr %s170, 192
        %s172 = scalar_lea.vmem [#allocation3], %s171
        // Predicated region
        $region29: #{tpu_custom_call.1} parent=27 // pred_check
          %p173 = pneg %p54
        $region30: #{tpu_custom_call.1} parent=27 // pred_check_branch
          %175 = sbr.rel (%p173) target = $region32
        $region31: #{tpu_custom_call.1} parent=27 // pred_region
          %177 = dma.done %s169, 3072
        $region32: #{tpu_custom_call.1} parent=27 // pred_fallthru
          _
        %s178 = sand.u32 %s41, 1
        %s179 = scalar_lea.sflag [#allocation4], %s178
        %s180 = sand.u32 %s41, 1
        %s181 = smul.addr %s180, 192
        %s182 = scalar_lea.vmem [#allocation3], %s181
        %p183 = pneg %p54
        %p184 = pneg %p51
        %s185 = smul.u32 12, %s24
        %p186 = scmp.lt.s32.totalorder %s185, 23
        %s187 = scalar_select %p186, %s185, 23
        %s188 = smul.addr %s187, 8
        %s189 = scalar_lea.vmem %s1, %s188
        %p190 = pneg %p80
        %p191 = pneg %p77
        %p192 = pneg %p108
        %p193 = pneg %p105
        %s194 = sand.u32 %s95, 1
        %s195 = scalar_lea.sflag [#allocation5], %s194
        %s196 = sand.u32 %s95, 1
        %s197 = smul.addr %s196, 192
        %s198 = scalar_lea.vmem [#allocation6], %s197
        %s199 = smul.u32 12, %s24
        %s200 = smul.u32 12, %s24
        %p201 = scmp.lt.s32.totalorder %s200, 23
        %s202 = scalar_select %p201, %s200, 23
        %s203 = smul.addr %s202, 8
        %s204 = scalar_lea.vmem %s1, %s203
        %s205 = smul.u32 12, %s24
        %s206 = smul.u32 12, %s24
        %207 = vst [vmem:[#allocation2] sm:$0xff] 0.0
        %208 = vst [vmem:[#allocation2 + $0x20] sm:$0xff] 0.0
        %209 = vst [vmem:[#allocation2 + $0x40] sm:$0xff] 0.0
        %210 = vst [vmem:[#allocation2 + $0x60] sm:$0xff] 0.0
        %211 = vst [vmem:[#allocation2 + $0x80] sm:$0xff] 0.0
        %212 = vst [vmem:[#allocation2 + $0xa0] sm:$0xff] 0.0
        %213 = vst [vmem:[#allocation2 + $0xc0] sm:$0xff] 0.0
        %214 = vst [vmem:[#allocation2 + $0xe0] sm:$0xff] 0.0
        %215 = vst [vmem:[#allocation2 + $0x100] sm:$0xff] 0.0
        %216 = vst [vmem:[#allocation2 + $0x120] sm:$0xff] 0.0
        %217 = vst [vmem:[#allocation2 + $0x140] sm:$0xff] 0.0
        %218 = vst [vmem:[#allocation2 + $0x160] sm:$0xff] 0.0
        %219 = vst [vmem:[#allocation2 + $0x18] sm:$0xff] 0.0
        %220 = vst [vmem:[#allocation2 + $0x38] sm:$0xff] 0.0
        %221 = vst [vmem:[#allocation2 + $0x58] sm:$0xff] 0.0
        %222 = vst [vmem:[#allocation2 + $0x78] sm:$0xff] 0.0
        %223 = vst [vmem:[#allocation2 + $0x98] sm:$0xff] 0.0
        %224 = vst [vmem:[#allocation2 + $0xb8] sm:$0xff] 0.0
        %225 = vst [vmem:[#allocation2 + $0xd8] sm:$0xff] 0.0
        %226 = vst [vmem:[#allocation2 + $0xf8] sm:$0xff] 0.0
        %227 = vst [vmem:[#allocation2 + $0x118] sm:$0xff] 0.0
        %228 = vst [vmem:[#allocation2 + $0x138] sm:$0xff] 0.0
        %229 = vst [vmem:[#allocation2 + $0x158] sm:$0xff] 0.0
        %230 = vst [vmem:[#allocation2 + $0x178] sm:$0xff] 0.0
        %v231 = vld [vmem:[%s172] sm:$0xff]
        %v232 = vld [vmem:[%s172 + $0x8] sm:$0xff]
        %v233 = vld [vmem:[%s172 + $0x10] sm:$0xff]
        %v234 = vld [vmem:[%s172 + $0x18] sm:$0xff]
        %v235 = vld [vmem:[%s172 + $0x20] sm:$0xff]
        %v236 = vld [vmem:[%s172 + $0x28] sm:$0xff]
        %v237 = vld [vmem:[%s172 + $0x30] sm:$0xff]
        %v238 = vld [vmem:[%s172 + $0x38] sm:$0xff]
        %v239 = vld [vmem:[%s172 + $0x40] sm:$0xff]
        %v240 = vld [vmem:[%s172 + $0x48] sm:$0xff]
        %v241 = vld [vmem:[%s172 + $0x50] sm:$0xff]
        %v242 = vld [vmem:[%s172 + $0x58] sm:$0xff]
        %v243 = vld [vmem:[%s172 + $0x60] sm:$0xff]
        %v244 = vld [vmem:[%s172 + $0x68] sm:$0xff]
        %v245 = vld [vmem:[%s172 + $0x70] sm:$0xff]
        %v246 = vld [vmem:[%s172 + $0x78] sm:$0xff]
        %v247 = vld [vmem:[%s172 + $0x80] sm:$0xff]
        %v248 = vld [vmem:[%s172 + $0x88] sm:$0xff]
        %v249 = vld [vmem:[%s172 + $0x90] sm:$0xff]
        %v250 = vld [vmem:[%s172 + $0x98] sm:$0xff]
        %v251 = vld [vmem:[%s172 + $0xa0] sm:$0xff]
        %v252 = vld [vmem:[%s172 + $0xa8] sm:$0xff]
        %v253 = vld [vmem:[%s172 + $0xb0] sm:$0xff]
        %v254 = vld [vmem:[%s172 + $0xb8] sm:$0xff]
        %255 = vst [vmem:[#allocation2 + $0x8] sm:$0xff] %v231
        %256 = vst [vmem:[#allocation2 + $0x10] sm:$0xff] %v232
        %257 = vst [vmem:[#allocation2 + $0x28] sm:$0xff] %v233
        %258 = vst [vmem:[#allocation2 + $0x30] sm:$0xff] %v234
        %259 = vst [vmem:[#allocation2 + $0x48] sm:$0xff] %v235
        %260 = vst [vmem:[#allocation2 + $0x50] sm:$0xff] %v236
        %261 = vst [vmem:[#allocation2 + $0x68] sm:$0xff] %v237
        %262 = vst [vmem:[#allocation2 + $0x70] sm:$0xff] %v238
        %263 = vst [vmem:[#allocation2 + $0x88] sm:$0xff] %v239
        %264 = vst [vmem:[#allocation2 + $0x90] sm:$0xff] %v240
        %265 = vst [vmem:[#allocation2 + $0xa8] sm:$0xff] %v241
        %266 = vst [vmem:[#allocation2 + $0xb0] sm:$0xff] %v242
        %267 = vst [vmem:[#allocation2 + $0xc8] sm:$0xff] %v243
        %268 = vst [vmem:[#allocation2 + $0xd0] sm:$0xff] %v244
        %269 = vst [vmem:[#allocation2 + $0xe8] sm:$0xff] %v245
        %270 = vst [vmem:[#allocation2 + $0xf0] sm:$0xff] %v246
        %271 = vst [vmem:[#allocation2 + $0x108] sm:$0xff] %v247
        %272 = vst [vmem:[#allocation2 + $0x110] sm:$0xff] %v248
        %273 = vst [vmem:[#allocation2 + $0x128] sm:$0xff] %v249
        %274 = vst [vmem:[#allocation2 + $0x130] sm:$0xff] %v250
        %275 = vst [vmem:[#allocation2 + $0x148] sm:$0xff] %v251
        %276 = vst [vmem:[#allocation2 + $0x150] sm:$0xff] %v252
        %277 = vst [vmem:[#allocation2 + $0x168] sm:$0xff] %v253
        %278 = vst [vmem:[#allocation2 + $0x170] sm:$0xff] %v254
        %v279 = vld [vmem:[%s204] sm:$0xff]
        %v280 = vld [vmem:[%s204 + $0x8] sm:$0xff]
        %v281 = vld [vmem:[%s204 + $0x10] sm:$0xff]
        %v282 = vld [vmem:[%s204 + $0x18] sm:$0xff]
        %v283 = vld [vmem:[%s204 + $0x20] sm:$0xff]
        %v284 = vld [vmem:[%s204 + $0x28] sm:$0xff]
        %v285 = vld [vmem:[%s204 + $0x30] sm:$0xff]
        %v286 = vld [vmem:[%s204 + $0x38] sm:$0xff]
        %v287 = vld [vmem:[%s204 + $0x40] sm:$0xff]
        %v288 = vld [vmem:[%s204 + $0x48] sm:$0xff]
        %v289 = vld [vmem:[%s204 + $0x50] sm:$0xff]
        %v290 = vld [vmem:[%s204 + $0x58] sm:$0xff]
        %v291 = vlaneseq
        %v292 = vand.u32 %v291, 127
        %v293 = vadd.s32 %v292, 128
        %vm294 = vcmp.lt.s32.totalorder %v292, 0
        %v295 = vsub.s32 0, %v292
        %v296 = vsel %vm294, %v295, %v292
        %v297 = vshrl.u32 %v296, 4
        %v298 = vand.u32 %v296, 15
        %v299 = vsub.s32 0, %v298
        %v300 = vsel %vm294, %v299, %v298
        %vm301 = vcmp.lt.s32.totalorder %v293, 0
        %v302 = vsub.s32 0, %v293
        %v303 = vsel %vm301, %v302, %v293
        %v304 = vshrl.u32 %v303, 4
        %v305 = vand.u32 %v303, 15
        %v306 = vsub.s32 0, %v305
        %v307 = vsel %vm301, %v306, %v305
        %vm308 = vcmp.ne.s32.totalorder %v300, 0
        %vm309 = vcmp.ne.s32.totalorder %v307, 0
        %vm310 = vcmp.lt.s32.totalorder %v300, 0
        %vm311 = vcmp.lt.s32.totalorder %v307, 0
        %vm312 = vmand %vm310, %vm308
        %vm313 = vmand %vm311, %vm309
        %v314 = vadd.s32 %v300, 16
        %v315 = vadd.s32 %v307, 16
        %v316 = vsel %vm312, %v314, %v300
        %v317 = vsel %vm313, %v315, %v307
        %v318 = vld [vmem:[#allocation2] sm:$0xff]
        %v319 = vld [vmem:[#allocation2 + $0x8] sm:$0xff]
        %v320 = vld [vmem:[#allocation2 + $0x10] sm:$0xff]
        %v321 = vld [vmem:[#allocation2 + $0x20] sm:$0xff]
        %v322 = vld [vmem:[#allocation2 + $0x28] sm:$0xff]
        %v323 = vld [vmem:[#allocation2 + $0x30] sm:$0xff]
        %v324 = vld [vmem:[#allocation2 + $0x40] sm:$0xff]
        %v325 = vld [vmem:[#allocation2 + $0x48] sm:$0xff]
        %v326 = vld [vmem:[#allocation2 + $0x50] sm:$0xff]
        %v327 = vld [vmem:[#allocation2 + $0x60] sm:$0xff]
        %v328 = vld [vmem:[#allocation2 + $0x68] sm:$0xff]
        %v329 = vld [vmem:[#allocation2 + $0x70] sm:$0xff]
        %v330 = vld [vmem:[#allocation2 + $0x80] sm:$0xff]
        %v331 = vld [vmem:[#allocation2 + $0x88] sm:$0xff]
        %v332 = vld [vmem:[#allocation2 + $0x90] sm:$0xff]
        %v333 = vld [vmem:[#allocation2 + $0xa0] sm:$0xff]
        %v334 = vld [vmem:[#allocation2 + $0xa8] sm:$0xff]
        %v335 = vld [vmem:[#allocation2 + $0xb0] sm:$0xff]
        %v336 = vld [vmem:[#allocation2 + $0xc0] sm:$0xff]
        %v337 = vld [vmem:[#allocation2 + $0xc8] sm:$0xff]
        %v338 = vld [vmem:[#allocation2 + $0xd0] sm:$0xff]
        %v339 = vld [vmem:[#allocation2 + $0xe0] sm:$0xff]
        %v340 = vld [vmem:[#allocation2 + $0xe8] sm:$0xff]
        %v341 = vld [vmem:[#allocation2 + $0xf0] sm:$0xff]
        %v342 = vld [vmem:[#allocation2 + $0x100] sm:$0xff]
        %v343 = vld [vmem:[#allocation2 + $0x108] sm:$0xff]
        %v344 = vld [vmem:[#allocation2 + $0x110] sm:$0xff]
        %v345 = vld [vmem:[#allocation2 + $0x120] sm:$0xff]
        %v346 = vld [vmem:[#allocation2 + $0x128] sm:$0xff]
        %v347 = vld [vmem:[#allocation2 + $0x130] sm:$0xff]
        %v348 = vld [vmem:[#allocation2 + $0x140] sm:$0xff]
        %v349 = vld [vmem:[#allocation2 + $0x148] sm:$0xff]
        %v350 = vld [vmem:[#allocation2 + $0x150] sm:$0xff]
        %v351 = vld [vmem:[#allocation2 + $0x160] sm:$0xff]
        %v352 = vld [vmem:[#allocation2 + $0x168] sm:$0xff]
        %v353 = vld [vmem:[#allocation2 + $0x170] sm:$0xff]
        %355 = vset.pattern.permute.xlu0 1
        %356 = vperm.xlu0 %355, %v279
        %v357 = vpop.permute.xlu0 %356
        %360 = vset.pattern.permute.xlu0 1
        %361 = vperm.xlu0 %360, %v280
        %v362 = vpop.permute.xlu0 %361
        %365 = vset.pattern.permute.xlu0 1
        %366 = vperm.xlu0 %365, %v281
        %v367 = vpop.permute.xlu0 %366
        %370 = vset.pattern.permute.xlu0 1
        %371 = vperm.xlu0 %370, %v282
        %v372 = vpop.permute.xlu0 %371
        %375 = vset.pattern.permute.xlu0 1
        %376 = vperm.xlu0 %375, %v283
        %v377 = vpop.permute.xlu0 %376
        %380 = vset.pattern.permute.xlu0 1
        %381 = vperm.xlu0 %380, %v284
        %v382 = vpop.permute.xlu0 %381
        %385 = vset.pattern.permute.xlu0 1
        %386 = vperm.xlu0 %385, %v285
        %v387 = vpop.permute.xlu0 %386
        %390 = vset.pattern.permute.xlu0 1
        %391 = vperm.xlu0 %390, %v286
        %v392 = vpop.permute.xlu0 %391
        %395 = vset.pattern.permute.xlu0 1
        %396 = vperm.xlu0 %395, %v287
        %v397 = vpop.permute.xlu0 %396
        %400 = vset.pattern.permute.xlu0 1
        %401 = vperm.xlu0 %400, %v288
        %v402 = vpop.permute.xlu0 %401
        %405 = vset.pattern.permute.xlu0 1
        %406 = vperm.xlu0 %405, %v289
        %v407 = vpop.permute.xlu0 %406
        %410 = vset.pattern.permute.xlu0 1
        %411 = vperm.xlu0 %410, %v290
        %v412 = vpop.permute.xlu0 %411
        %v414 = vmul.f32 %v318, %v357
        %v415 = vmul.f32 %v319, %v357
        %v416 = vmul.f32 %v320, %v357
        %v417 = vmul.f32 %v321, %v362
        %v418 = vmul.f32 %v322, %v362
        %v419 = vmul.f32 %v323, %v362
        %v420 = vmul.f32 %v324, %v367
        %v421 = vmul.f32 %v325, %v367
        %v422 = vmul.f32 %v326, %v367
        %v423 = vmul.f32 %v327, %v372
        %v424 = vmul.f32 %v328, %v372
        %v425 = vmul.f32 %v329, %v372
        %v426 = vmul.f32 %v330, %v377
        %v427 = vmul.f32 %v331, %v377
        %v428 = vmul.f32 %v332, %v377
        %v429 = vmul.f32 %v333, %v382
        %v430 = vmul.f32 %v334, %v382
        %v431 = vmul.f32 %v335, %v382
        %v432 = vmul.f32 %v336, %v387
        %v433 = vmul.f32 %v337, %v387
        %v434 = vmul.f32 %v338, %v387
        %v435 = vmul.f32 %v339, %v392
        %v436 = vmul.f32 %v340, %v392
        %v437 = vmul.f32 %v341, %v392
        %v438 = vmul.f32 %v342, %v397
        %v439 = vmul.f32 %v343, %v397
        %v440 = vmul.f32 %v344, %v397
        %v441 = vmul.f32 %v345, %v402
        %v442 = vmul.f32 %v346, %v402
        %v443 = vmul.f32 %v347, %v402
        %v444 = vmul.f32 %v348, %v407
        %v445 = vmul.f32 %v349, %v407
        %v446 = vmul.f32 %v350, %v407
        %v447 = vmul.f32 %v351, %v412
        %v448 = vmul.f32 %v352, %v412
        %v449 = vmul.f32 %v353, %v412
        %450 = vset.pattern.permute.xlu0 4
        %451 = vperm.xlu0 %450, %v279
        %v452 = vpop.permute.xlu0 %451
        %454 = vset.pattern.permute.xlu0 4
        %455 = vperm.xlu0 %454, %v280
        %v456 = vpop.permute.xlu0 %455
        %458 = vset.pattern.permute.xlu0 4
        %459 = vperm.xlu0 %458, %v281
        %v460 = vpop.permute.xlu0 %459
        %462 = vset.pattern.permute.xlu0 4
        %463 = vperm.xlu0 %462, %v282
        %v464 = vpop.permute.xlu0 %463
        %466 = vset.pattern.permute.xlu0 4
        %467 = vperm.xlu0 %466, %v283
        %v468 = vpop.permute.xlu0 %467
        %470 = vset.pattern.permute.xlu0 4
        %471 = vperm.xlu0 %470, %v284
        %v472 = vpop.permute.xlu0 %471
        %474 = vset.pattern.permute.xlu0 4
        %475 = vperm.xlu0 %474, %v285
        %v476 = vpop.permute.xlu0 %475
        %478 = vset.pattern.permute.xlu0 4
        %479 = vperm.xlu0 %478, %v286
        %v480 = vpop.permute.xlu0 %479
        %482 = vset.pattern.permute.xlu0 4
        %483 = vperm.xlu0 %482, %v287
        %v484 = vpop.permute.xlu0 %483
        %486 = vset.pattern.permute.xlu0 4
        %487 = vperm.xlu0 %486, %v288
        %v488 = vpop.permute.xlu0 %487
        %490 = vset.pattern.permute.xlu0 4
        %491 = vperm.xlu0 %490, %v289
        %v492 = vpop.permute.xlu0 %491
        %494 = vset.pattern.permute.xlu0 4
        %495 = vperm.xlu0 %494, %v290
        %v496 = vpop.permute.xlu0 %495
        %v498 = vmul.f32 %v319, %v452
        %v499 = vmul.f32 %v320, %v452
        %v500 = vmul.f32 %v322, %v456
        %v501 = vmul.f32 %v323, %v456
        %v502 = vmul.f32 %v325, %v460
        %v503 = vmul.f32 %v326, %v460
        %v504 = vmul.f32 %v328, %v464
        %v505 = vmul.f32 %v329, %v464
        %v506 = vmul.f32 %v331, %v468
        %v507 = vmul.f32 %v332, %v468
        %v508 = vmul.f32 %v334, %v472
        %v509 = vmul.f32 %v335, %v472
        %v510 = vmul.f32 %v337, %v476
        %v511 = vmul.f32 %v338, %v476
        %v512 = vmul.f32 %v340, %v480
        %v513 = vmul.f32 %v341, %v480
        %v514 = vmul.f32 %v343, %v484
        %v515 = vmul.f32 %v344, %v484
        %v516 = vmul.f32 %v346, %v488
        %v517 = vmul.f32 %v347, %v488
        %v518 = vmul.f32 %v349, %v492
        %v519 = vmul.f32 %v350, %v492
        %v520 = vmul.f32 %v352, %v496
        %v521 = vmul.f32 %v353, %v496
        %546 = vrot.lane.b32.xlu0 %v498, 112
        %v547 = vpop.permute.xlu0 %546
        %548 = vrot.lane.b32.xlu0 %v499, 112
        %v549 = vpop.permute.xlu0 %548
        %550 = vrot.lane.b32.xlu0 %v500, 112
        %v551 = vpop.permute.xlu0 %550
        %552 = vrot.lane.b32.xlu0 %v501, 112
        %v553 = vpop.permute.xlu0 %552
        %554 = vrot.lane.b32.xlu0 %v502, 112
        %v555 = vpop.permute.xlu0 %554
        %556 = vrot.lane.b32.xlu0 %v503, 112
        %v557 = vpop.permute.xlu0 %556
        %558 = vrot.lane.b32.xlu0 %v504, 112
        %v559 = vpop.permute.xlu0 %558
        %560 = vrot.lane.b32.xlu0 %v505, 112
        %v561 = vpop.permute.xlu0 %560
        %562 = vrot.lane.b32.xlu0 %v506, 112
        %v563 = vpop.permute.xlu0 %562
        %564 = vrot.lane.b32.xlu0 %v507, 112
        %v565 = vpop.permute.xlu0 %564
        %566 = vrot.lane.b32.xlu0 %v508, 112
        %v567 = vpop.permute.xlu0 %566
        %568 = vrot.lane.b32.xlu0 %v509, 112
        %v569 = vpop.permute.xlu0 %568
        %570 = vrot.lane.b32.xlu0 %v510, 112
        %v571 = vpop.permute.xlu0 %570
        %572 = vrot.lane.b32.xlu0 %v511, 112
        %v573 = vpop.permute.xlu0 %572
        %574 = vrot.lane.b32.xlu0 %v512, 112
        %v575 = vpop.permute.xlu0 %574
        %576 = vrot.lane.b32.xlu0 %v513, 112
        %v577 = vpop.permute.xlu0 %576
        %578 = vrot.lane.b32.xlu0 %v514, 112
        %v579 = vpop.permute.xlu0 %578
        %580 = vrot.lane.b32.xlu0 %v515, 112
        %v581 = vpop.permute.xlu0 %580
        %582 = vrot.lane.b32.xlu0 %v516, 112
        %v583 = vpop.permute.xlu0 %582
        %584 = vrot.lane.b32.xlu0 %v517, 112
        %v585 = vpop.permute.xlu0 %584
        %586 = vrot.lane.b32.xlu0 %v518, 112
        %v587 = vpop.permute.xlu0 %586
        %588 = vrot.lane.b32.xlu0 %v519, 112
        %v589 = vpop.permute.xlu0 %588
        %590 = vrot.lane.b32.xlu0 %v520, 112
        %v591 = vpop.permute.xlu0 %590
        %592 = vrot.lane.b32.xlu0 %v521, 112
        %v593 = vpop.permute.xlu0 %592
        %vm594 = vcmask 916480
        %v595 = vsel %vm594, %v547, %v549
        %v596 = vsel %vm594, %v551, %v553
        %v597 = vsel %vm594, %v555, %v557
        %v598 = vsel %vm594, %v559, %v561
        %v599 = vsel %vm594, %v563, %v565
        %v600 = vsel %vm594, %v567, %v569
        %v601 = vsel %vm594, %v571, %v573
        %v602 = vsel %vm594, %v575, %v577
        %v603 = vsel %vm594, %v579, %v581
        %v604 = vsel %vm594, %v583, %v585
        %v605 = vsel %vm594, %v587, %v589
        %v606 = vsel %vm594, %v591, %v593
        %v643 = vadd.f32 %v414, %v547
        %v644 = vadd.f32 %v415, %v595
        %v645 = vadd.f32 %v416, %v549
        %v646 = vadd.f32 %v417, %v551
        %v647 = vadd.f32 %v418, %v596
        %v648 = vadd.f32 %v419, %v553
        %v649 = vadd.f32 %v420, %v555
        %v650 = vadd.f32 %v421, %v597
        %v651 = vadd.f32 %v422, %v557
        %v652 = vadd.f32 %v423, %v559
        %v653 = vadd.f32 %v424, %v598
        %v654 = vadd.f32 %v425, %v561
        %v655 = vadd.f32 %v426, %v563
        %v656 = vadd.f32 %v427, %v599
        %v657 = vadd.f32 %v428, %v565
        %v658 = vadd.f32 %v429, %v567
        %v659 = vadd.f32 %v430, %v600
        %v660 = vadd.f32 %v431, %v569
        %v661 = vadd.f32 %v432, %v571
        %v662 = vadd.f32 %v433, %v601
        %v663 = vadd.f32 %v434, %v573
        %v664 = vadd.f32 %v435, %v575
        %v665 = vadd.f32 %v436, %v602
        %v666 = vadd.f32 %v437, %v577
        %v667 = vadd.f32 %v438, %v579
        %v668 = vadd.f32 %v439, %v603
        %v669 = vadd.f32 %v440, %v581
        %v670 = vadd.f32 %v441, %v583
        %v671 = vadd.f32 %v442, %v604
        %v672 = vadd.f32 %v443, %v585
        %v673 = vadd.f32 %v444, %v587
        %v674 = vadd.f32 %v445, %v605
        %v675 = vadd.f32 %v446, %v589
        %v676 = vadd.f32 %v447, %v591
        %v677 = vadd.f32 %v448, %v606
        %v678 = vadd.f32 %v449, %v593
        %v679 = vld [vmem:[#allocation2 + $0x8] sm:$0xff]
        %v680 = vld [vmem:[#allocation2 + $0x10] sm:$0xff]
        %v681 = vld [vmem:[#allocation2 + $0x18] sm:$0xff]
        %v682 = vld [vmem:[#allocation2 + $0x28] sm:$0xff]
        %v683 = vld [vmem:[#allocation2 + $0x30] sm:$0xff]
        %v684 = vld [vmem:[#allocation2 + $0x38] sm:$0xff]
        %v685 = vld [vmem:[#allocation2 + $0x48] sm:$0xff]
        %v686 = vld [vmem:[#allocation2 + $0x50] sm:$0xff]
        %v687 = vld [vmem:[#allocation2 + $0x58] sm:$0xff]
        %v688 = vld [vmem:[#allocation2 + $0x68] sm:$0xff]
        %v689 = vld [vmem:[#allocation2 + $0x70] sm:$0xff]
        %v690 = vld [vmem:[#allocation2 + $0x78] sm:$0xff]
        %v691 = vld [vmem:[#allocation2 + $0x88] sm:$0xff]
        %v692 = vld [vmem:[#allocation2 + $0x90] sm:$0xff]
        %v693 = vld [vmem:[#allocation2 + $0x98] sm:$0xff]
        %v694 = vld [vmem:[#allocation2 + $0xa8] sm:$0xff]
        %v695 = vld [vmem:[#allocation2 + $0xb0] sm:$0xff]
        %v696 = vld [vmem:[#allocation2 + $0xb8] sm:$0xff]
        %v697 = vld [vmem:[#allocation2 + $0xc8] sm:$0xff]
        %v698 = vld [vmem:[#allocation2 + $0xd0] sm:$0xff]
        %v699 = vld [vmem:[#allocation2 + $0xd8] sm:$0xff]
        %v700 = vld [vmem:[#allocation2 + $0xe8] sm:$0xff]
        %v701 = vld [vmem:[#allocation2 + $0xf0] sm:$0xff]
        %v702 = vld [vmem:[#allocation2 + $0xf8] sm:$0xff]
        %v703 = vld [vmem:[#allocation2 + $0x108] sm:$0xff]
        %v704 = vld [vmem:[#allocation2 + $0x110] sm:$0xff]
        %v705 = vld [vmem:[#allocation2 + $0x118] sm:$0xff]
        %v706 = vld [vmem:[#allocation2 + $0x128] sm:$0xff]
        %v707 = vld [vmem:[#allocation2 + $0x130] sm:$0xff]
        %v708 = vld [vmem:[#allocation2 + $0x138] sm:$0xff]
        %v709 = vld [vmem:[#allocation2 + $0x148] sm:$0xff]
        %v710 = vld [vmem:[#allocation2 + $0x150] sm:$0xff]
        %v711 = vld [vmem:[#allocation2 + $0x158] sm:$0xff]
        %v712 = vld [vmem:[#allocation2 + $0x168] sm:$0xff]
        %v713 = vld [vmem:[#allocation2 + $0x170] sm:$0xff]
        %v714 = vld [vmem:[#allocation2 + $0x178] sm:$0xff]
        %715 = vset.pattern.permute.xlu0 7
        %716 = vperm.xlu0 %715, %v279
        %v717 = vpop.permute.xlu0 %716
        %719 = vset.pattern.permute.xlu0 7
        %720 = vperm.xlu0 %719, %v280
        %v721 = vpop.permute.xlu0 %720
        %723 = vset.pattern.permute.xlu0 7
        %724 = vperm.xlu0 %723, %v281
        %v725 = vpop.permute.xlu0 %724
        %727 = vset.pattern.permute.xlu0 7
        %728 = vperm.xlu0 %727, %v282
        %v729 = vpop.permute.xlu0 %728
        %731 = vset.pattern.permute.xlu0 7
        %732 = vperm.xlu0 %731, %v283
        %v733 = vpop.permute.xlu0 %732
        %735 = vset.pattern.permute.xlu0 7
        %736 = vperm.xlu0 %735, %v284
        %v737 = vpop.permute.xlu0 %736
        %739 = vset.pattern.permute.xlu0 7
        %740 = vperm.xlu0 %739, %v285
        %v741 = vpop.permute.xlu0 %740
        %743 = vset.pattern.permute.xlu0 7
        %744 = vperm.xlu0 %743, %v286
        %v745 = vpop.permute.xlu0 %744
        %747 = vset.pattern.permute.xlu0 7
        %748 = vperm.xlu0 %747, %v287
        %v749 = vpop.permute.xlu0 %748
        %751 = vset.pattern.permute.xlu0 7
        %752 = vperm.xlu0 %751, %v288
        %v753 = vpop.permute.xlu0 %752
        %755 = vset.pattern.permute.xlu0 7
        %756 = vperm.xlu0 %755, %v289
        %v757 = vpop.permute.xlu0 %756
        %759 = vset.pattern.permute.xlu0 7
        %760 = vperm.xlu0 %759, %v290
        %v761 = vpop.permute.xlu0 %760
        %v763 = vmul.f32 %v679, %v717
        %v764 = vmul.f32 %v680, %v717
        %v765 = vmul.f32 %v681, %v717
        %v766 = vmul.f32 %v682, %v721
        %v767 = vmul.f32 %v683, %v721
        %v768 = vmul.f32 %v684, %v721
        %v769 = vmul.f32 %v685, %v725
        %v770 = vmul.f32 %v686, %v725
        %v771 = vmul.f32 %v687, %v725
        %v772 = vmul.f32 %v688, %v729
        %v773 = vmul.f32 %v689, %v729
        %v774 = vmul.f32 %v690, %v729
        %v775 = vmul.f32 %v691, %v733
        %v776 = vmul.f32 %v692, %v733
        %v777 = vmul.f32 %v693, %v733
        %v778 = vmul.f32 %v694, %v737
        %v779 = vmul.f32 %v695, %v737
        %v780 = vmul.f32 %v696, %v737
        %v781 = vmul.f32 %v697, %v741
        %v782 = vmul.f32 %v698, %v741
        %v783 = vmul.f32 %v699, %v741
        %v784 = vmul.f32 %v700, %v745
        %v785 = vmul.f32 %v701, %v745
        %v786 = vmul.f32 %v702, %v745
        %v787 = vmul.f32 %v703, %v749
        %v788 = vmul.f32 %v704, %v749
        %v789 = vmul.f32 %v705, %v749
        %v790 = vmul.f32 %v706, %v753
        %v791 = vmul.f32 %v707, %v753
        %v792 = vmul.f32 %v708, %v753
        %v793 = vmul.f32 %v709, %v757
        %v794 = vmul.f32 %v710, %v757
        %v795 = vmul.f32 %v711, %v757
        %v796 = vmul.f32 %v712, %v761
        %v797 = vmul.f32 %v713, %v761
        %v798 = vmul.f32 %v714, %v761
        %835 = vrot.lane.b32.xlu0 %v763, 96
        %v836 = vpop.permute.xlu0 %835
        %837 = vrot.lane.b32.xlu0 %v764, 96
        %v838 = vpop.permute.xlu0 %837
        %839 = vrot.lane.b32.xlu0 %v765, 96
        %v840 = vpop.permute.xlu0 %839
        %841 = vrot.lane.b32.xlu0 %v766, 96
        %v842 = vpop.permute.xlu0 %841
        %843 = vrot.lane.b32.xlu0 %v767, 96
        %v844 = vpop.permute.xlu0 %843
        %845 = vrot.lane.b32.xlu0 %v768, 96
        %v846 = vpop.permute.xlu0 %845
        %847 = vrot.lane.b32.xlu0 %v769, 96
        %v848 = vpop.permute.xlu0 %847
        %849 = vrot.lane.b32.xlu0 %v770, 96
        %v850 = vpop.permute.xlu0 %849
        %851 = vrot.lane.b32.xlu0 %v771, 96
        %v852 = vpop.permute.xlu0 %851
        %853 = vrot.lane.b32.xlu0 %v772, 96
        %v854 = vpop.permute.xlu0 %853
        %855 = vrot.lane.b32.xlu0 %v773, 96
        %v856 = vpop.permute.xlu0 %855
        %857 = vrot.lane.b32.xlu0 %v774, 96
        %v858 = vpop.permute.xlu0 %857
        %859 = vrot.lane.b32.xlu0 %v775, 96
        %v860 = vpop.permute.xlu0 %859
        %861 = vrot.lane.b32.xlu0 %v776, 96
        %v862 = vpop.permute.xlu0 %861
        %863 = vrot.lane.b32.xlu0 %v777, 96
        %v864 = vpop.permute.xlu0 %863
        %865 = vrot.lane.b32.xlu0 %v778, 96
        %v866 = vpop.permute.xlu0 %865
        %867 = vrot.lane.b32.xlu0 %v779, 96
        %v868 = vpop.permute.xlu0 %867
        %869 = vrot.lane.b32.xlu0 %v780, 96
        %v870 = vpop.permute.xlu0 %869
        %871 = vrot.lane.b32.xlu0 %v781, 96
        %v872 = vpop.permute.xlu0 %871
        %873 = vrot.lane.b32.xlu0 %v782, 96
        %v874 = vpop.permute.xlu0 %873
        %875 = vrot.lane.b32.xlu0 %v783, 96
        %v876 = vpop.permute.xlu0 %875
        %877 = vrot.lane.b32.xlu0 %v784, 96
        %v878 = vpop.permute.xlu0 %877
        %879 = vrot.lane.b32.xlu0 %v785, 96
        %v880 = vpop.permute.xlu0 %879
        %881 = vrot.lane.b32.xlu0 %v786, 96
        %v882 = vpop.permute.xlu0 %881
        %883 = vrot.lane.b32.xlu0 %v787, 96
        %v884 = vpop.permute.xlu0 %883
        %885 = vrot.lane.b32.xlu0 %v788, 96
        %v886 = vpop.permute.xlu0 %885
        %887 = vrot.lane.b32.xlu0 %v789, 96
        %v888 = vpop.permute.xlu0 %887
        %889 = vrot.lane.b32.xlu0 %v790, 96
        %v890 = vpop.permute.xlu0 %889
        %891 = vrot.lane.b32.xlu0 %v791, 96
        %v892 = vpop.permute.xlu0 %891
        %893 = vrot.lane.b32.xlu0 %v792, 96
        %v894 = vpop.permute.xlu0 %893
        %895 = vrot.lane.b32.xlu0 %v793, 96
        %v896 = vpop.permute.xlu0 %895
        %897 = vrot.lane.b32.xlu0 %v794, 96
        %v898 = vpop.permute.xlu0 %897
        %899 = vrot.lane.b32.xlu0 %v795, 96
        %v900 = vpop.permute.xlu0 %899
        %901 = vrot.lane.b32.xlu0 %v796, 96
        %v902 = vpop.permute.xlu0 %901
        %903 = vrot.lane.b32.xlu0 %v797, 96
        %v904 = vpop.permute.xlu0 %903
        %905 = vrot.lane.b32.xlu0 %v798, 96
        %v906 = vpop.permute.xlu0 %905
        %vm907 = vcmask 785408
        %v908 = vsel %vm907, %v836, %v838
        %v909 = vsel %vm907, %v838, %v840
        %v910 = vsel %vm907, %v842, %v844
        %v911 = vsel %vm907, %v844, %v846
        %v912 = vsel %vm907, %v848, %v850
        %v913 = vsel %vm907, %v850, %v852
        %v914 = vsel %vm907, %v854, %v856
        %v915 = vsel %vm907, %v856, %v858
        %v916 = vsel %vm907, %v860, %v862
        %v917 = vsel %vm907, %v862, %v864
        %v918 = vsel %vm907, %v866, %v868
        %v919 = vsel %vm907, %v868, %v870
        %v920 = vsel %vm907, %v872, %v874
        %v921 = vsel %vm907, %v874, %v876
        %v922 = vsel %vm907, %v878, %v880
        %v923 = vsel %vm907, %v880, %v882
        %v924 = vsel %vm907, %v884, %v886
        %v925 = vsel %vm907, %v886, %v888
        %v926 = vsel %vm907, %v890, %v892
        %v927 = vsel %vm907, %v892, %v894
        %v928 = vsel %vm907, %v896, %v898
        %v929 = vsel %vm907, %v898, %v900
        %v930 = vsel %vm907, %v902, %v904
        %v931 = vsel %vm907, %v904, %v906
        %v968 = vadd.f32 %v643, %v836
        %v969 = vadd.f32 %v644, %v908
        %v970 = vadd.f32 %v645, %v909
        %v971 = vadd.f32 %v646, %v842
        %v972 = vadd.f32 %v647, %v910
        %v973 = vadd.f32 %v648, %v911
        %v974 = vadd.f32 %v649, %v848
        %v975 = vadd.f32 %v650, %v912
        %v976 = vadd.f32 %v651, %v913
        %v977 = vadd.f32 %v652, %v854
        %v978 = vadd.f32 %v653, %v914
        %v979 = vadd.f32 %v654, %v915
        %v980 = vadd.f32 %v655, %v860
        %v981 = vadd.f32 %v656, %v916
        %v982 = vadd.f32 %v657, %v917
        %v983 = vadd.f32 %v658, %v866
        %v984 = vadd.f32 %v659, %v918
        %v985 = vadd.f32 %v660, %v919
        %v986 = vadd.f32 %v661, %v872
        %v987 = vadd.f32 %v662, %v920
        %v988 = vadd.f32 %v663, %v921
        %v989 = vadd.f32 %v664, %v878
        %v990 = vadd.f32 %v665, %v922
        %v991 = vadd.f32 %v666, %v923
        %v992 = vadd.f32 %v667, %v884
        %v993 = vadd.f32 %v668, %v924
        %v994 = vadd.f32 %v669, %v925
        %v995 = vadd.f32 %v670, %v890
        %v996 = vadd.f32 %v671, %v926
        %v997 = vadd.f32 %v672, %v927
        %v998 = vadd.f32 %v673, %v896
        %v999 = vadd.f32 %v674, %v928
        %v1000 = vadd.f32 %v675, %v929
        %v1001 = vadd.f32 %v676, %v902
        %v1002 = vadd.f32 %v677, %v930
        %v1003 = vadd.f32 %v678, %v931
        %vm1004 = vcmp.ne.s32.totalorder %v316, 0
        %vm1005 = vcmp.ne.s32.totalorder %v317, 0
        %1006 = vset.pattern.permute.xlu0 0
        %1007 = vperm.xlu0 %1006, %v279
        %v1008 = vpop.permute.xlu0 %1007
        %1010 = vset.pattern.permute.xlu0 0
        %1011 = vperm.xlu0 %1010, %v280
        %v1012 = vpop.permute.xlu0 %1011
        %1014 = vset.pattern.permute.xlu0 0
        %1015 = vperm.xlu0 %1014, %v281
        %v1016 = vpop.permute.xlu0 %1015
        %1018 = vset.pattern.permute.xlu0 0
        %1019 = vperm.xlu0 %1018, %v282
        %v1020 = vpop.permute.xlu0 %1019
        %1022 = vset.pattern.permute.xlu0 0
        %1023 = vperm.xlu0 %1022, %v283
        %v1024 = vpop.permute.xlu0 %1023
        %1026 = vset.pattern.permute.xlu0 0
        %1027 = vperm.xlu0 %1026, %v284
        %v1028 = vpop.permute.xlu0 %1027
        %1030 = vset.pattern.permute.xlu0 0
        %1031 = vperm.xlu0 %1030, %v285
        %v1032 = vpop.permute.xlu0 %1031
        %1034 = vset.pattern.permute.xlu0 0
        %1035 = vperm.xlu0 %1034, %v286
        %v1036 = vpop.permute.xlu0 %1035
        %1038 = vset.pattern.permute.xlu0 0
        %1039 = vperm.xlu0 %1038, %v287
        %v1040 = vpop.permute.xlu0 %1039
        %1042 = vset.pattern.permute.xlu0 0
        %1043 = vperm.xlu0 %1042, %v288
        %v1044 = vpop.permute.xlu0 %1043
        %1046 = vset.pattern.permute.xlu0 0
        %1047 = vperm.xlu0 %1046, %v289
        %v1048 = vpop.permute.xlu0 %1047
        %1050 = vset.pattern.permute.xlu0 0
        %1051 = vperm.xlu0 %1050, %v290
        %v1052 = vpop.permute.xlu0 %1051
        %v1054 = vmul.f32 %v318, %v1008
        %v1055 = vmul.f32 %v319, %v1008
        %v1056 = vmul.f32 %v320, %v1008
        %v1057 = vmul.f32 %v321, %v1012
        %v1058 = vmul.f32 %v322, %v1012
        %v1059 = vmul.f32 %v323, %v1012
        %v1060 = vmul.f32 %v324, %v1016
        %v1061 = vmul.f32 %v325, %v1016
        %v1062 = vmul.f32 %v326, %v1016
        %v1063 = vmul.f32 %v327, %v1020
        %v1064 = vmul.f32 %v328, %v1020
        %v1065 = vmul.f32 %v329, %v1020
        %v1066 = vmul.f32 %v330, %v1024
        %v1067 = vmul.f32 %v331, %v1024
        %v1068 = vmul.f32 %v332, %v1024
        %v1069 = vmul.f32 %v333, %v1028
        %v1070 = vmul.f32 %v334, %v1028
        %v1071 = vmul.f32 %v335, %v1028
        %v1072 = vmul.f32 %v336, %v1032
        %v1073 = vmul.f32 %v337, %v1032
        %v1074 = vmul.f32 %v338, %v1032
        %v1075 = vmul.f32 %v339, %v1036
        %v1076 = vmul.f32 %v340, %v1036
        %v1077 = vmul.f32 %v341, %v1036
        %v1078 = vmul.f32 %v342, %v1040
        %v1079 = vmul.f32 %v343, %v1040
        %v1080 = vmul.f32 %v344, %v1040
        %v1081 = vmul.f32 %v345, %v1044
        %v1082 = vmul.f32 %v346, %v1044
        %v1083 = vmul.f32 %v347, %v1044
        %v1084 = vmul.f32 %v348, %v1048
        %v1085 = vmul.f32 %v349, %v1048
        %v1086 = vmul.f32 %v350, %v1048
        %v1087 = vmul.f32 %v351, %v1052
        %v1088 = vmul.f32 %v352, %v1052
        %v1089 = vmul.f32 %v353, %v1052
        %1090 = vset.pattern.permute.xlu0 3
        %1091 = vperm.xlu0 %1090, %v279
        %v1092 = vpop.permute.xlu0 %1091
        %1094 = vset.pattern.permute.xlu0 3
        %1095 = vperm.xlu0 %1094, %v280
        %v1096 = vpop.permute.xlu0 %1095
        %1098 = vset.pattern.permute.xlu0 3
        %1099 = vperm.xlu0 %1098, %v281
        %v1100 = vpop.permute.xlu0 %1099
        %1102 = vset.pattern.permute.xlu0 3
        %1103 = vperm.xlu0 %1102, %v282
        %v1104 = vpop.permute.xlu0 %1103
        %1106 = vset.pattern.permute.xlu0 3
        %1107 = vperm.xlu0 %1106, %v283
        %v1108 = vpop.permute.xlu0 %1107
        %1110 = vset.pattern.permute.xlu0 3
        %1111 = vperm.xlu0 %1110, %v284
        %v1112 = vpop.permute.xlu0 %1111
        %1114 = vset.pattern.permute.xlu0 3
        %1115 = vperm.xlu0 %1114, %v285
        %v1116 = vpop.permute.xlu0 %1115
        %1118 = vset.pattern.permute.xlu0 3
        %1119 = vperm.xlu0 %1118, %v286
        %v1120 = vpop.permute.xlu0 %1119
        %1122 = vset.pattern.permute.xlu0 3
        %1123 = vperm.xlu0 %1122, %v287
        %v1124 = vpop.permute.xlu0 %1123
        %1126 = vset.pattern.permute.xlu0 3
        %1127 = vperm.xlu0 %1126, %v288
        %v1128 = vpop.permute.xlu0 %1127
        %1130 = vset.pattern.permute.xlu0 3
        %1131 = vperm.xlu0 %1130, %v289
        %v1132 = vpop.permute.xlu0 %1131
        %1134 = vset.pattern.permute.xlu0 3
        %1135 = vperm.xlu0 %1134, %v290
        %v1136 = vpop.permute.xlu0 %1135
        %v1138 = vmul.f32 %v318, %v1092
        %v1139 = vmul.f32 %v319, %v1092
        %v1140 = vmul.f32 %v320, %v1092
        %v1141 = vmul.f32 %v321, %v1096
        %v1142 = vmul.f32 %v322, %v1096
        %v1143 = vmul.f32 %v323, %v1096
        %v1144 = vmul.f32 %v324, %v1100
        %v1145 = vmul.f32 %v325, %v1100
        %v1146 = vmul.f32 %v326, %v1100
        %v1147 = vmul.f32 %v327, %v1104
        %v1148 = vmul.f32 %v328, %v1104
        %v1149 = vmul.f32 %v329, %v1104
        %v1150 = vmul.f32 %v330, %v1108
        %v1151 = vmul.f32 %v331, %v1108
        %v1152 = vmul.f32 %v332, %v1108
        %v1153 = vmul.f32 %v333, %v1112
        %v1154 = vmul.f32 %v334, %v1112
        %v1155 = vmul.f32 %v335, %v1112
        %v1156 = vmul.f32 %v336, %v1116
        %v1157 = vmul.f32 %v337, %v1116
        %v1158 = vmul.f32 %v338, %v1116
        %v1159 = vmul.f32 %v339, %v1120
        %v1160 = vmul.f32 %v340, %v1120
        %v1161 = vmul.f32 %v341, %v1120
        %v1162 = vmul.f32 %v342, %v1124
        %v1163 = vmul.f32 %v343, %v1124
        %v1164 = vmul.f32 %v344, %v1124
        %v1165 = vmul.f32 %v345, %v1128
        %v1166 = vmul.f32 %v346, %v1128
        %v1167 = vmul.f32 %v347, %v1128
        %v1168 = vmul.f32 %v348, %v1132
        %v1169 = vmul.f32 %v349, %v1132
        %v1170 = vmul.f32 %v350, %v1132
        %v1171 = vmul.f32 %v351, %v1136
        %v1172 = vmul.f32 %v352, %v1136
        %v1173 = vmul.f32 %v353, %v1136
        %1210 = vrot.lane.b32.xlu0 %v1138, 112
        %v1211 = vpop.permute.xlu0 %1210
        %1212 = vrot.lane.b32.xlu0 %v1139, 112
        %v1213 = vpop.permute.xlu0 %1212
        %1214 = vrot.lane.b32.xlu0 %v1140, 112
        %v1215 = vpop.permute.xlu0 %1214
        %1216 = vrot.lane.b32.xlu0 %v1141, 112
        %v1217 = vpop.permute.xlu0 %1216
        %1218 = vrot.lane.b32.xlu0 %v1142, 112
        %v1219 = vpop.permute.xlu0 %1218
        %1220 = vrot.lane.b32.xlu0 %v1143, 112
        %v1221 = vpop.permute.xlu0 %1220
        %1222 = vrot.lane.b32.xlu0 %v1144, 112
        %v1223 = vpop.permute.xlu0 %1222
        %1224 = vrot.lane.b32.xlu0 %v1145, 112
        %v1225 = vpop.permute.xlu0 %1224
        %1226 = vrot.lane.b32.xlu0 %v1146, 112
        %v1227 = vpop.permute.xlu0 %1226
        %1228 = vrot.lane.b32.xlu0 %v1147, 112
        %v1229 = vpop.permute.xlu0 %1228
        %1230 = vrot.lane.b32.xlu0 %v1148, 112
        %v1231 = vpop.permute.xlu0 %1230
        %1232 = vrot.lane.b32.xlu0 %v1149, 112
        %v1233 = vpop.permute.xlu0 %1232
        %1234 = vrot.lane.b32.xlu0 %v1150, 112
        %v1235 = vpop.permute.xlu0 %1234
        %1236 = vrot.lane.b32.xlu0 %v1151, 112
        %v1237 = vpop.permute.xlu0 %1236
        %1238 = vrot.lane.b32.xlu0 %v1152, 112
        %v1239 = vpop.permute.xlu0 %1238
        %1240 = vrot.lane.b32.xlu0 %v1153, 112
        %v1241 = vpop.permute.xlu0 %1240
        %1242 = vrot.lane.b32.xlu0 %v1154, 112
        %v1243 = vpop.permute.xlu0 %1242
        %1244 = vrot.lane.b32.xlu0 %v1155, 112
        %v1245 = vpop.permute.xlu0 %1244
        %1246 = vrot.lane.b32.xlu0 %v1156, 112
        %v1247 = vpop.permute.xlu0 %1246
        %1248 = vrot.lane.b32.xlu0 %v1157, 112
        %v1249 = vpop.permute.xlu0 %1248
        %1250 = vrot.lane.b32.xlu0 %v1158, 112
        %v1251 = vpop.permute.xlu0 %1250
        %1252 = vrot.lane.b32.xlu0 %v1159, 112
        %v1253 = vpop.permute.xlu0 %1252
        %1254 = vrot.lane.b32.xlu0 %v1160, 112
        %v1255 = vpop.permute.xlu0 %1254
        %1256 = vrot.lane.b32.xlu0 %v1161, 112
        %v1257 = vpop.permute.xlu0 %1256
        %1258 = vrot.lane.b32.xlu0 %v1162, 112
        %v1259 = vpop.permute.xlu0 %1258
        %1260 = vrot.lane.b32.xlu0 %v1163, 112
        %v1261 = vpop.permute.xlu0 %1260
        %1262 = vrot.lane.b32.xlu0 %v1164, 112
        %v1263 = vpop.permute.xlu0 %1262
        %1264 = vrot.lane.b32.xlu0 %v1165, 112
        %v1265 = vpop.permute.xlu0 %1264
        %1266 = vrot.lane.b32.xlu0 %v1166, 112
        %v1267 = vpop.permute.xlu0 %1266
        %1268 = vrot.lane.b32.xlu0 %v1167, 112
        %v1269 = vpop.permute.xlu0 %1268
        %1270 = vrot.lane.b32.xlu0 %v1168, 112
        %v1271 = vpop.permute.xlu0 %1270
        %1272 = vrot.lane.b32.xlu0 %v1169, 112
        %v1273 = vpop.permute.xlu0 %1272
        %1274 = vrot.lane.b32.xlu0 %v1170, 112
        %v1275 = vpop.permute.xlu0 %1274
        %1276 = vrot.lane.b32.xlu0 %v1171, 112
        %v1277 = vpop.permute.xlu0 %1276
        %1278 = vrot.lane.b32.xlu0 %v1172, 112
        %v1279 = vpop.permute.xlu0 %1278
        %1280 = vrot.lane.b32.xlu0 %v1173, 112
        %v1281 = vpop.permute.xlu0 %1280
        %v1282 = vsel %vm594, %v1211, %v1213
        %v1283 = vsel %vm594, %v1213, %v1215
        %v1284 = vsel %vm594, %v1217, %v1219
        %v1285 = vsel %vm594, %v1219, %v1221
        %v1286 = vsel %vm594, %v1223, %v1225
        %v1287 = vsel %vm594, %v1225, %v1227
        %v1288 = vsel %vm594, %v1229, %v1231
        %v1289 = vsel %vm594, %v1231, %v1233
        %v1290 = vsel %vm594, %v1235, %v1237
        %v1291 = vsel %vm594, %v1237, %v1239
        %v1292 = vsel %vm594, %v1241, %v1243
        %v1293 = vsel %vm594, %v1243, %v1245
        %v1294 = vsel %vm594, %v1247, %v1249
        %v1295 = vsel %vm594, %v1249, %v1251
        %v1296 = vsel %vm594, %v1253, %v1255
        %v1297 = vsel %vm594, %v1255, %v1257
        %v1298 = vsel %vm594, %v1259, %v1261
        %v1299 = vsel %vm594, %v1261, %v1263
        %v1300 = vsel %vm594, %v1265, %v1267
        %v1301 = vsel %vm594, %v1267, %v1269
        %v1302 = vsel %vm594, %v1271, %v1273
        %v1303 = vsel %vm594, %v1273, %v1275
        %v1304 = vsel %vm594, %v1277, %v1279
        %v1305 = vsel %vm594, %v1279, %v1281
        %v1342 = vadd.f32 %v1054, %v1282
        %v1343 = vadd.f32 %v1055, %v1283
        %v1344 = vadd.f32 %v1056, %v1215
        %v1345 = vadd.f32 %v1057, %v1284
        %v1346 = vadd.f32 %v1058, %v1285
        %v1347 = vadd.f32 %v1059, %v1221
        %v1348 = vadd.f32 %v1060, %v1286
        %v1349 = vadd.f32 %v1061, %v1287
        %v1350 = vadd.f32 %v1062, %v1227
        %v1351 = vadd.f32 %v1063, %v1288
        %v1352 = vadd.f32 %v1064, %v1289
        %v1353 = vadd.f32 %v1065, %v1233
        %v1354 = vadd.f32 %v1066, %v1290
        %v1355 = vadd.f32 %v1067, %v1291
        %v1356 = vadd.f32 %v1068, %v1239
        %v1357 = vadd.f32 %v1069, %v1292
        %v1358 = vadd.f32 %v1070, %v1293
        %v1359 = vadd.f32 %v1071, %v1245
        %v1360 = vadd.f32 %v1072, %v1294
        %v1361 = vadd.f32 %v1073, %v1295
        %v1362 = vadd.f32 %v1074, %v1251
        %v1363 = vadd.f32 %v1075, %v1296
        %v1364 = vadd.f32 %v1076, %v1297
        %v1365 = vadd.f32 %v1077, %v1257
        %v1366 = vadd.f32 %v1078, %v1298
        %v1367 = vadd.f32 %v1079, %v1299
        %v1368 = vadd.f32 %v1080, %v1263
        %v1369 = vadd.f32 %v1081, %v1300
        %v1370 = vadd.f32 %v1082, %v1301
        %v1371 = vadd.f32 %v1083, %v1269
        %v1372 = vadd.f32 %v1084, %v1302
        %v1373 = vadd.f32 %v1085, %v1303
        %v1374 = vadd.f32 %v1086, %v1275
        %v1375 = vadd.f32 %v1087, %v1304
        %v1376 = vadd.f32 %v1088, %v1305
        %v1377 = vadd.f32 %v1089, %v1281
        %1378 = vset.pattern.permute.xlu0 6
        %1379 = vperm.xlu0 %1378, %v279
        %v1380 = vpop.permute.xlu0 %1379
        %1382 = vset.pattern.permute.xlu0 6
        %1383 = vperm.xlu0 %1382, %v280
        %v1384 = vpop.permute.xlu0 %1383
        %1386 = vset.pattern.permute.xlu0 6
        %1387 = vperm.xlu0 %1386, %v281
        %v1388 = vpop.permute.xlu0 %1387
        %1390 = vset.pattern.permute.xlu0 6
        %1391 = vperm.xlu0 %1390, %v282
        %v1392 = vpop.permute.xlu0 %1391
        %1394 = vset.pattern.permute.xlu0 6
        %1395 = vperm.xlu0 %1394, %v283
        %v1396 = vpop.permute.xlu0 %1395
        %1398 = vset.pattern.permute.xlu0 6
        %1399 = vperm.xlu0 %1398, %v284
        %v1400 = vpop.permute.xlu0 %1399
        %1402 = vset.pattern.permute.xlu0 6
        %1403 = vperm.xlu0 %1402, %v285
        %v1404 = vpop.permute.xlu0 %1403
        %1406 = vset.pattern.permute.xlu0 6
        %1407 = vperm.xlu0 %1406, %v286
        %v1408 = vpop.permute.xlu0 %1407
        %1410 = vset.pattern.permute.xlu0 6
        %1411 = vperm.xlu0 %1410, %v287
        %v1412 = vpop.permute.xlu0 %1411
        %1414 = vset.pattern.permute.xlu0 6
        %1415 = vperm.xlu0 %1414, %v288
        %v1416 = vpop.permute.xlu0 %1415
        %1418 = vset.pattern.permute.xlu0 6
        %1419 = vperm.xlu0 %1418, %v289
        %v1420 = vpop.permute.xlu0 %1419
        %1422 = vset.pattern.permute.xlu0 6
        %1423 = vperm.xlu0 %1422, %v290
        %v1424 = vpop.permute.xlu0 %1423
        %v1426 = vmul.f32 %v679, %v1380
        %v1427 = vmul.f32 %v680, %v1380
        %v1428 = vmul.f32 %v681, %v1380
        %v1429 = vmul.f32 %v682, %v1384
        %v1430 = vmul.f32 %v683, %v1384
        %v1431 = vmul.f32 %v684, %v1384
        %v1432 = vmul.f32 %v685, %v1388
        %v1433 = vmul.f32 %v686, %v1388
        %v1434 = vmul.f32 %v687, %v1388
        %v1435 = vmul.f32 %v688, %v1392
        %v1436 = vmul.f32 %v689, %v1392
        %v1437 = vmul.f32 %v690, %v1392
        %v1438 = vmul.f32 %v691, %v1396
        %v1439 = vmul.f32 %v692, %v1396
        %v1440 = vmul.f32 %v693, %v1396
        %v1441 = vmul.f32 %v694, %v1400
        %v1442 = vmul.f32 %v695, %v1400
        %v1443 = vmul.f32 %v696, %v1400
        %v1444 = vmul.f32 %v697, %v1404
        %v1445 = vmul.f32 %v698, %v1404
        %v1446 = vmul.f32 %v699, %v1404
        %v1447 = vmul.f32 %v700, %v1408
        %v1448 = vmul.f32 %v701, %v1408
        %v1449 = vmul.f32 %v702, %v1408
        %v1450 = vmul.f32 %v703, %v1412
        %v1451 = vmul.f32 %v704, %v1412
        %v1452 = vmul.f32 %v705, %v1412
        %v1453 = vmul.f32 %v706, %v1416
        %v1454 = vmul.f32 %v707, %v1416
        %v1455 = vmul.f32 %v708, %v1416
        %v1456 = vmul.f32 %v709, %v1420
        %v1457 = vmul.f32 %v710, %v1420
        %v1458 = vmul.f32 %v711, %v1420
        %v1459 = vmul.f32 %v712, %v1424
        %v1460 = vmul.f32 %v713, %v1424
        %v1461 = vmul.f32 %v714, %v1424
        %1498 = vrot.lane.b32.xlu0 %v1426, 96
        %v1499 = vpop.permute.xlu0 %1498
        %1500 = vrot.lane.b32.xlu0 %v1427, 96
        %v1501 = vpop.permute.xlu0 %1500
        %1502 = vrot.lane.b32.xlu0 %v1428, 96
        %v1503 = vpop.permute.xlu0 %1502
        %1504 = vrot.lane.b32.xlu0 %v1429, 96
        %v1505 = vpop.permute.xlu0 %1504
        %1506 = vrot.lane.b32.xlu0 %v1430, 96
        %v1507 = vpop.permute.xlu0 %1506
        %1508 = vrot.lane.b32.xlu0 %v1431, 96
        %v1509 = vpop.permute.xlu0 %1508
        %1510 = vrot.lane.b32.xlu0 %v1432, 96
        %v1511 = vpop.permute.xlu0 %1510
        %1512 = vrot.lane.b32.xlu0 %v1433, 96
        %v1513 = vpop.permute.xlu0 %1512
        %1514 = vrot.lane.b32.xlu0 %v1434, 96
        %v1515 = vpop.permute.xlu0 %1514
        %1516 = vrot.lane.b32.xlu0 %v1435, 96
        %v1517 = vpop.permute.xlu0 %1516
        %1518 = vrot.lane.b32.xlu0 %v1436, 96
        %v1519 = vpop.permute.xlu0 %1518
        %1520 = vrot.lane.b32.xlu0 %v1437, 96
        %v1521 = vpop.permute.xlu0 %1520
        %1522 = vrot.lane.b32.xlu0 %v1438, 96
        %v1523 = vpop.permute.xlu0 %1522
        %1524 = vrot.lane.b32.xlu0 %v1439, 96
        %v1525 = vpop.permute.xlu0 %1524
        %1526 = vrot.lane.b32.xlu0 %v1440, 96
        %v1527 = vpop.permute.xlu0 %1526
        %1528 = vrot.lane.b32.xlu0 %v1441, 96
        %v1529 = vpop.permute.xlu0 %1528
        %1530 = vrot.lane.b32.xlu0 %v1442, 96
        %v1531 = vpop.permute.xlu0 %1530
        %1532 = vrot.lane.b32.xlu0 %v1443, 96
        %v1533 = vpop.permute.xlu0 %1532
        %1534 = vrot.lane.b32.xlu0 %v1444, 96
        %v1535 = vpop.permute.xlu0 %1534
        %1536 = vrot.lane.b32.xlu0 %v1445, 96
        %v1537 = vpop.permute.xlu0 %1536
        %1538 = vrot.lane.b32.xlu0 %v1446, 96
        %v1539 = vpop.permute.xlu0 %1538
        %1540 = vrot.lane.b32.xlu0 %v1447, 96
        %v1541 = vpop.permute.xlu0 %1540
        %1542 = vrot.lane.b32.xlu0 %v1448, 96
        %v1543 = vpop.permute.xlu0 %1542
        %1544 = vrot.lane.b32.xlu0 %v1449, 96
        %v1545 = vpop.permute.xlu0 %1544
        %1546 = vrot.lane.b32.xlu0 %v1450, 96
        %v1547 = vpop.permute.xlu0 %1546
        %1548 = vrot.lane.b32.xlu0 %v1451, 96
        %v1549 = vpop.permute.xlu0 %1548
        %1550 = vrot.lane.b32.xlu0 %v1452, 96
        %v1551 = vpop.permute.xlu0 %1550
        %1552 = vrot.lane.b32.xlu0 %v1453, 96
        %v1553 = vpop.permute.xlu0 %1552
        %1554 = vrot.lane.b32.xlu0 %v1454, 96
        %v1555 = vpop.permute.xlu0 %1554
        %1556 = vrot.lane.b32.xlu0 %v1455, 96
        %v1557 = vpop.permute.xlu0 %1556
        %1558 = vrot.lane.b32.xlu0 %v1456, 96
        %v1559 = vpop.permute.xlu0 %1558
        %1560 = vrot.lane.b32.xlu0 %v1457, 96
        %v1561 = vpop.permute.xlu0 %1560
        %1562 = vrot.lane.b32.xlu0 %v1458, 96
        %v1563 = vpop.permute.xlu0 %1562
        %1564 = vrot.lane.b32.xlu0 %v1459, 96
        %v1565 = vpop.permute.xlu0 %1564
        %1566 = vrot.lane.b32.xlu0 %v1460, 96
        %v1567 = vpop.permute.xlu0 %1566
        %1568 = vrot.lane.b32.xlu0 %v1461, 96
        %v1569 = vpop.permute.xlu0 %1568
        %v1570 = vsel %vm907, %v1499, %v1501
        %v1571 = vsel %vm907, %v1501, %v1503
        %v1572 = vsel %vm907, %v1505, %v1507
        %v1573 = vsel %vm907, %v1507, %v1509
        %v1574 = vsel %vm907, %v1511, %v1513
        %v1575 = vsel %vm907, %v1513, %v1515
        %v1576 = vsel %vm907, %v1517, %v1519
        %v1577 = vsel %vm907, %v1519, %v1521
        %v1578 = vsel %vm907, %v1523, %v1525
        %v1579 = vsel %vm907, %v1525, %v1527
        %v1580 = vsel %vm907, %v1529, %v1531
        %v1581 = vsel %vm907, %v1531, %v1533
        %v1582 = vsel %vm907, %v1535, %v1537
        %v1583 = vsel %vm907, %v1537, %v1539
        %v1584 = vsel %vm907, %v1541, %v1543
        %v1585 = vsel %vm907, %v1543, %v1545
        %v1586 = vsel %vm907, %v1547, %v1549
        %v1587 = vsel %vm907, %v1549, %v1551
        %v1588 = vsel %vm907, %v1553, %v1555
        %v1589 = vsel %vm907, %v1555, %v1557
        %v1590 = vsel %vm907, %v1559, %v1561
        %v1591 = vsel %vm907, %v1561, %v1563
        %v1592 = vsel %vm907, %v1565, %v1567
        %v1593 = vsel %vm907, %v1567, %v1569
        %v1630 = vadd.f32 %v1342, %v1499
        %v1631 = vadd.f32 %v1343, %v1570
        %v1632 = vadd.f32 %v1344, %v1571
        %v1633 = vadd.f32 %v1345, %v1505
        %v1634 = vadd.f32 %v1346, %v1572
        %v1635 = vadd.f32 %v1347, %v1573
        %v1636 = vadd.f32 %v1348, %v1511
        %v1637 = vadd.f32 %v1349, %v1574
        %v1638 = vadd.f32 %v1350, %v1575
        %v1639 = vadd.f32 %v1351, %v1517
        %v1640 = vadd.f32 %v1352, %v1576
        %v1641 = vadd.f32 %v1353, %v1577
        %v1642 = vadd.f32 %v1354, %v1523
        %v1643 = vadd.f32 %v1355, %v1578
        %v1644 = vadd.f32 %v1356, %v1579
        %v1645 = vadd.f32 %v1357, %v1529
        %v1646 = vadd.f32 %v1358, %v1580
        %v1647 = vadd.f32 %v1359, %v1581
        %v1648 = vadd.f32 %v1360, %v1535
        %v1649 = vadd.f32 %v1361, %v1582
        %v1650 = vadd.f32 %v1362, %v1583
        %v1651 = vadd.f32 %v1363, %v1541
        %v1652 = vadd.f32 %v1364, %v1584
        %v1653 = vadd.f32 %v1365, %v1585
        %v1654 = vadd.f32 %v1366, %v1547
        %v1655 = vadd.f32 %v1367, %v1586
        %v1656 = vadd.f32 %v1368, %v1587
        %v1657 = vadd.f32 %v1369, %v1553
        %v1658 = vadd.f32 %v1370, %v1588
        %v1659 = vadd.f32 %v1371, %v1589
        %v1660 = vadd.f32 %v1372, %v1559
        %v1661 = vadd.f32 %v1373, %v1590
        %v1662 = vadd.f32 %v1374, %v1591
        %v1663 = vadd.f32 %v1375, %v1565
        %v1664 = vadd.f32 %v1376, %v1592
        %v1665 = vadd.f32 %v1377, %v1593
        %v1666 = vsel %vm1004, 1, 0
        %v1667 = vsel %vm1005, 1, 0
        %vm1668 = vcmp.eq.s32.totalorder %v1666, 1
        %vm1669 = vcmp.eq.s32.totalorder %v1667, 1
        %1706 = vrot.lane.b32.xlu0 %v1630, 17
        %v1707 = vpop.permute.xlu0 %1706
        %1708 = vrot.lane.b32.xlu0 %v1631, 17
        %v1709 = vpop.permute.xlu0 %1708
        %1710 = vrot.lane.b32.xlu0 %v1632, 17
        %v1711 = vpop.permute.xlu0 %1710
        %1712 = vrot.lane.b32.xlu0 %v1633, 17
        %v1713 = vpop.permute.xlu0 %1712
        %1714 = vrot.lane.b32.xlu0 %v1634, 17
        %v1715 = vpop.permute.xlu0 %1714
        %1716 = vrot.lane.b32.xlu0 %v1635, 17
        %v1717 = vpop.permute.xlu0 %1716
        %1718 = vrot.lane.b32.xlu0 %v1636, 17
        %v1719 = vpop.permute.xlu0 %1718
        %1720 = vrot.lane.b32.xlu0 %v1637, 17
        %v1721 = vpop.permute.xlu0 %1720
        %1722 = vrot.lane.b32.xlu0 %v1638, 17
        %v1723 = vpop.permute.xlu0 %1722
        %1724 = vrot.lane.b32.xlu0 %v1639, 17
        %v1725 = vpop.permute.xlu0 %1724
        %1726 = vrot.lane.b32.xlu0 %v1640, 17
        %v1727 = vpop.permute.xlu0 %1726
        %1728 = vrot.lane.b32.xlu0 %v1641, 17
        %v1729 = vpop.permute.xlu0 %1728
        %1730 = vrot.lane.b32.xlu0 %v1642, 17
        %v1731 = vpop.permute.xlu0 %1730
        %1732 = vrot.lane.b32.xlu0 %v1643, 17
        %v1733 = vpop.permute.xlu0 %1732
        %1734 = vrot.lane.b32.xlu0 %v1644, 17
        %v1735 = vpop.permute.xlu0 %1734
        %1736 = vrot.lane.b32.xlu0 %v1645, 17
        %v1737 = vpop.permute.xlu0 %1736
        %1738 = vrot.lane.b32.xlu0 %v1646, 17
        %v1739 = vpop.permute.xlu0 %1738
        %1740 = vrot.lane.b32.xlu0 %v1647, 17
        %v1741 = vpop.permute.xlu0 %1740
        %1742 = vrot.lane.b32.xlu0 %v1648, 17
        %v1743 = vpop.permute.xlu0 %1742
        %1744 = vrot.lane.b32.xlu0 %v1649, 17
        %v1745 = vpop.permute.xlu0 %1744
        %1746 = vrot.lane.b32.xlu0 %v1650, 17
        %v1747 = vpop.permute.xlu0 %1746
        %1748 = vrot.lane.b32.xlu0 %v1651, 17
        %v1749 = vpop.permute.xlu0 %1748
        %1750 = vrot.lane.b32.xlu0 %v1652, 17
        %v1751 = vpop.permute.xlu0 %1750
        %1752 = vrot.lane.b32.xlu0 %v1653, 17
        %v1753 = vpop.permute.xlu0 %1752
        %1754 = vrot.lane.b32.xlu0 %v1654, 17
        %v1755 = vpop.permute.xlu0 %1754
        %1756 = vrot.lane.b32.xlu0 %v1655, 17
        %v1757 = vpop.permute.xlu0 %1756
        %1758 = vrot.lane.b32.xlu0 %v1656, 17
        %v1759 = vpop.permute.xlu0 %1758
        %1760 = vrot.lane.b32.xlu0 %v1657, 17
        %v1761 = vpop.permute.xlu0 %1760
        %1762 = vrot.lane.b32.xlu0 %v1658, 17
        %v1763 = vpop.permute.xlu0 %1762
        %1764 = vrot.lane.b32.xlu0 %v1659, 17
        %v1765 = vpop.permute.xlu0 %1764
        %1766 = vrot.lane.b32.xlu0 %v1660, 17
        %v1767 = vpop.permute.xlu0 %1766
        %1768 = vrot.lane.b32.xlu0 %v1661, 17
        %v1769 = vpop.permute.xlu0 %1768
        %1770 = vrot.lane.b32.xlu0 %v1662, 17
        %v1771 = vpop.permute.xlu0 %1770
        %1772 = vrot.lane.b32.xlu0 %v1663, 17
        %v1773 = vpop.permute.xlu0 %1772
        %1774 = vrot.lane.b32.xlu0 %v1664, 17
        %v1775 = vpop.permute.xlu0 %1774
        %1776 = vrot.lane.b32.xlu0 %v1665, 17
        %v1777 = vpop.permute.xlu0 %1776
        %vm1778 = vcmask 138240
        %v1779 = vsel %vm1778, %v1707, %v1709
        %v1780 = vsel %vm1778, %v1709, %v1711
        %v1781 = vsel %vm1778, %v1713, %v1715
        %v1782 = vsel %vm1778, %v1715, %v1717
        %v1783 = vsel %vm1778, %v1719, %v1721
        %v1784 = vsel %vm1778, %v1721, %v1723
        %v1785 = vsel %vm1778, %v1725, %v1727
        %v1786 = vsel %vm1778, %v1727, %v1729
        %v1787 = vsel %vm1778, %v1731, %v1733
        %v1788 = vsel %vm1778, %v1733, %v1735
        %v1789 = vsel %vm1778, %v1737, %v1739
        %v1790 = vsel %vm1778, %v1739, %v1741
        %v1791 = vsel %vm1778, %v1743, %v1745
        %v1792 = vsel %vm1778, %v1745, %v1747
        %v1793 = vsel %vm1778, %v1749, %v1751
        %v1794 = vsel %vm1778, %v1751, %v1753
        %v1795 = vsel %vm1778, %v1755, %v1757
        %v1796 = vsel %vm1778, %v1757, %v1759
        %v1797 = vsel %vm1778, %v1761, %v1763
        %v1798 = vsel %vm1778, %v1763, %v1765
        %v1799 = vsel %vm1778, %v1767, %v1769
        %v1800 = vsel %vm1778, %v1769, %v1771
        %v1801 = vsel %vm1778, %v1773, %v1775
        %v1802 = vsel %vm1778, %v1775, %v1777
        %v1827 = vsel %vm1668, %v1779, 0.0
        %v1828 = vsel %vm1669, %v1780, 0.0
        %v1829 = vsel %vm1668, %v1781, 0.0
        %v1830 = vsel %vm1669, %v1782, 0.0
        %v1831 = vsel %vm1668, %v1783, 0.0
        %v1832 = vsel %vm1669, %v1784, 0.0
        %v1833 = vsel %vm1668, %v1785, 0.0
        %v1834 = vsel %vm1669, %v1786, 0.0
        %v1835 = vsel %vm1668, %v1787, 0.0
        %v1836 = vsel %vm1669, %v1788, 0.0
        %v1837 = vsel %vm1668, %v1789, 0.0
        %v1838 = vsel %vm1669, %v1790, 0.0
        %v1839 = vsel %vm1668, %v1791, 0.0
        %v1840 = vsel %vm1669, %v1792, 0.0
        %v1841 = vsel %vm1668, %v1793, 0.0
        %v1842 = vsel %vm1669, %v1794, 0.0
        %v1843 = vsel %vm1668, %v1795, 0.0
        %v1844 = vsel %vm1669, %v1796, 0.0
        %v1845 = vsel %vm1668, %v1797, 0.0
        %v1846 = vsel %vm1669, %v1798, 0.0
        %v1847 = vsel %vm1668, %v1799, 0.0
        %v1848 = vsel %vm1669, %v1800, 0.0
        %v1849 = vsel %vm1668, %v1801, 0.0
        %v1850 = vsel %vm1669, %v1802, 0.0
        %1875 = vrot.lane.b32.xlu0 %v1827, 112
        %v1876 = vpop.permute.xlu0 %1875
        %1877 = vrot.lane.b32.xlu0 %v1828, 112
        %v1878 = vpop.permute.xlu0 %1877
        %1879 = vrot.lane.b32.xlu0 %v1829, 112
        %v1880 = vpop.permute.xlu0 %1879
        %1881 = vrot.lane.b32.xlu0 %v1830, 112
        %v1882 = vpop.permute.xlu0 %1881
        %1883 = vrot.lane.b32.xlu0 %v1831, 112
        %v1884 = vpop.permute.xlu0 %1883
        %1885 = vrot.lane.b32.xlu0 %v1832, 112
        %v1886 = vpop.permute.xlu0 %1885
        %1887 = vrot.lane.b32.xlu0 %v1833, 112
        %v1888 = vpop.permute.xlu0 %1887
        %1889 = vrot.lane.b32.xlu0 %v1834, 112
        %v1890 = vpop.permute.xlu0 %1889
        %1891 = vrot.lane.b32.xlu0 %v1835, 112
        %v1892 = vpop.permute.xlu0 %1891
        %1893 = vrot.lane.b32.xlu0 %v1836, 112
        %v1894 = vpop.permute.xlu0 %1893
        %1895 = vrot.lane.b32.xlu0 %v1837, 112
        %v1896 = vpop.permute.xlu0 %1895
        %1897 = vrot.lane.b32.xlu0 %v1838, 112
        %v1898 = vpop.permute.xlu0 %1897
        %1899 = vrot.lane.b32.xlu0 %v1839, 112
        %v1900 = vpop.permute.xlu0 %1899
        %1901 = vrot.lane.b32.xlu0 %v1840, 112
        %v1902 = vpop.permute.xlu0 %1901
        %1903 = vrot.lane.b32.xlu0 %v1841, 112
        %v1904 = vpop.permute.xlu0 %1903
        %1905 = vrot.lane.b32.xlu0 %v1842, 112
        %v1906 = vpop.permute.xlu0 %1905
        %1907 = vrot.lane.b32.xlu0 %v1843, 112
        %v1908 = vpop.permute.xlu0 %1907
        %1909 = vrot.lane.b32.xlu0 %v1844, 112
        %v1910 = vpop.permute.xlu0 %1909
        %1911 = vrot.lane.b32.xlu0 %v1845, 112
        %v1912 = vpop.permute.xlu0 %1911
        %1913 = vrot.lane.b32.xlu0 %v1846, 112
        %v1914 = vpop.permute.xlu0 %1913
        %1915 = vrot.lane.b32.xlu0 %v1847, 112
        %v1916 = vpop.permute.xlu0 %1915
        %1917 = vrot.lane.b32.xlu0 %v1848, 112
        %v1918 = vpop.permute.xlu0 %1917
        %1919 = vrot.lane.b32.xlu0 %v1849, 112
        %v1920 = vpop.permute.xlu0 %1919
        %1921 = vrot.lane.b32.xlu0 %v1850, 112
        %v1922 = vpop.permute.xlu0 %1921
        %v1923 = vsel %vm594, %v1876, %v1878
        %v1924 = vsel %vm594, %v1880, %v1882
        %v1925 = vsel %vm594, %v1884, %v1886
        %v1926 = vsel %vm594, %v1888, %v1890
        %v1927 = vsel %vm594, %v1892, %v1894
        %v1928 = vsel %vm594, %v1896, %v1898
        %v1929 = vsel %vm594, %v1900, %v1902
        %v1930 = vsel %vm594, %v1904, %v1906
        %v1931 = vsel %vm594, %v1908, %v1910
        %v1932 = vsel %vm594, %v1912, %v1914
        %v1933 = vsel %vm594, %v1916, %v1918
        %v1934 = vsel %vm594, %v1920, %v1922
        %v1971 = vadd.f32 %v968, %v1876
        %v1972 = vadd.f32 %v969, %v1923
        %v1973 = vadd.f32 %v970, %v1878
        %v1974 = vadd.f32 %v971, %v1880
        %v1975 = vadd.f32 %v972, %v1924
        %v1976 = vadd.f32 %v973, %v1882
        %v1977 = vadd.f32 %v974, %v1884
        %v1978 = vadd.f32 %v975, %v1925
        %v1979 = vadd.f32 %v976, %v1886
        %v1980 = vadd.f32 %v977, %v1888
        %v1981 = vadd.f32 %v978, %v1926
        %v1982 = vadd.f32 %v979, %v1890
        %v1983 = vadd.f32 %v980, %v1892
        %v1984 = vadd.f32 %v981, %v1927
        %v1985 = vadd.f32 %v982, %v1894
        %v1986 = vadd.f32 %v983, %v1896
        %v1987 = vadd.f32 %v984, %v1928
        %v1988 = vadd.f32 %v985, %v1898
        %v1989 = vadd.f32 %v986, %v1900
        %v1990 = vadd.f32 %v987, %v1929
        %v1991 = vadd.f32 %v988, %v1902
        %v1992 = vadd.f32 %v989, %v1904
        %v1993 = vadd.f32 %v990, %v1930
        %v1994 = vadd.f32 %v991, %v1906
        %v1995 = vadd.f32 %v992, %v1908
        %v1996 = vadd.f32 %v993, %v1931
        %v1997 = vadd.f32 %v994, %v1910
        %v1998 = vadd.f32 %v995, %v1912
        %v1999 = vadd.f32 %v996, %v1932
        %v2000 = vadd.f32 %v997, %v1914
        %v2001 = vadd.f32 %v998, %v1916
        %v2002 = vadd.f32 %v999, %v1933
        %v2003 = vadd.f32 %v1000, %v1918
        %v2004 = vadd.f32 %v1001, %v1920
        %v2005 = vadd.f32 %v1002, %v1934
        %v2006 = vadd.f32 %v1003, %v1922
        %vm2007 = vcmp.ne.s32.totalorder %v316, 15
        %vm2008 = vcmp.ne.s32.totalorder %v317, 15
        %2009 = vset.pattern.permute.xlu0 2
        %2010 = vperm.xlu0 %2009, %v279
        %v2011 = vpop.permute.xlu0 %2010
        %2013 = vset.pattern.permute.xlu0 2
        %2014 = vperm.xlu0 %2013, %v280
        %v2015 = vpop.permute.xlu0 %2014
        %2017 = vset.pattern.permute.xlu0 2
        %2018 = vperm.xlu0 %2017, %v281
        %v2019 = vpop.permute.xlu0 %2018
        %2021 = vset.pattern.permute.xlu0 2
        %2022 = vperm.xlu0 %2021, %v282
        %v2023 = vpop.permute.xlu0 %2022
        %2025 = vset.pattern.permute.xlu0 2
        %2026 = vperm.xlu0 %2025, %v283
        %v2027 = vpop.permute.xlu0 %2026
        %2029 = vset.pattern.permute.xlu0 2
        %2030 = vperm.xlu0 %2029, %v284
        %v2031 = vpop.permute.xlu0 %2030
        %2033 = vset.pattern.permute.xlu0 2
        %2034 = vperm.xlu0 %2033, %v285
        %v2035 = vpop.permute.xlu0 %2034
        %2037 = vset.pattern.permute.xlu0 2
        %2038 = vperm.xlu0 %2037, %v286
        %v2039 = vpop.permute.xlu0 %2038
        %2041 = vset.pattern.permute.xlu0 2
        %2042 = vperm.xlu0 %2041, %v287
        %v2043 = vpop.permute.xlu0 %2042
        %2045 = vset.pattern.permute.xlu0 2
        %2046 = vperm.xlu0 %2045, %v288
        %v2047 = vpop.permute.xlu0 %2046
        %2049 = vset.pattern.permute.xlu0 2
        %2050 = vperm.xlu0 %2049, %v289
        %v2051 = vpop.permute.xlu0 %2050
        %2053 = vset.pattern.permute.xlu0 2
        %2054 = vperm.xlu0 %2053, %v290
        %v2055 = vpop.permute.xlu0 %2054
        %v2057 = vmul.f32 %v318, %v2011
        %v2058 = vmul.f32 %v319, %v2011
        %v2059 = vmul.f32 %v320, %v2011
        %v2060 = vmul.f32 %v321, %v2015
        %v2061 = vmul.f32 %v322, %v2015
        %v2062 = vmul.f32 %v323, %v2015
        %v2063 = vmul.f32 %v324, %v2019
        %v2064 = vmul.f32 %v325, %v2019
        %v2065 = vmul.f32 %v326, %v2019
        %v2066 = vmul.f32 %v327, %v2023
        %v2067 = vmul.f32 %v328, %v2023
        %v2068 = vmul.f32 %v329, %v2023
        %v2069 = vmul.f32 %v330, %v2027
        %v2070 = vmul.f32 %v331, %v2027
        %v2071 = vmul.f32 %v332, %v2027
        %v2072 = vmul.f32 %v333, %v2031
        %v2073 = vmul.f32 %v334, %v2031
        %v2074 = vmul.f32 %v335, %v2031
        %v2075 = vmul.f32 %v336, %v2035
        %v2076 = vmul.f32 %v337, %v2035
        %v2077 = vmul.f32 %v338, %v2035
        %v2078 = vmul.f32 %v339, %v2039
        %v2079 = vmul.f32 %v340, %v2039
        %v2080 = vmul.f32 %v341, %v2039
        %v2081 = vmul.f32 %v342, %v2043
        %v2082 = vmul.f32 %v343, %v2043
        %v2083 = vmul.f32 %v344, %v2043
        %v2084 = vmul.f32 %v345, %v2047
        %v2085 = vmul.f32 %v346, %v2047
        %v2086 = vmul.f32 %v347, %v2047
        %v2087 = vmul.f32 %v348, %v2051
        %v2088 = vmul.f32 %v349, %v2051
        %v2089 = vmul.f32 %v350, %v2051
        %v2090 = vmul.f32 %v351, %v2055
        %v2091 = vmul.f32 %v352, %v2055
        %v2092 = vmul.f32 %v353, %v2055
        %2093 = vset.pattern.permute.xlu0 5
        %2094 = vperm.xlu0 %2093, %v279
        %v2095 = vpop.permute.xlu0 %2094
        %2097 = vset.pattern.permute.xlu0 5
        %2098 = vperm.xlu0 %2097, %v280
        %v2099 = vpop.permute.xlu0 %2098
        %2101 = vset.pattern.permute.xlu0 5
        %2102 = vperm.xlu0 %2101, %v281
        %v2103 = vpop.permute.xlu0 %2102
        %2105 = vset.pattern.permute.xlu0 5
        %2106 = vperm.xlu0 %2105, %v282
        %v2107 = vpop.permute.xlu0 %2106
        %2109 = vset.pattern.permute.xlu0 5
        %2110 = vperm.xlu0 %2109, %v283
        %v2111 = vpop.permute.xlu0 %2110
        %2113 = vset.pattern.permute.xlu0 5
        %2114 = vperm.xlu0 %2113, %v284
        %v2115 = vpop.permute.xlu0 %2114
        %2117 = vset.pattern.permute.xlu0 5
        %2118 = vperm.xlu0 %2117, %v285
        %v2119 = vpop.permute.xlu0 %2118
        %2121 = vset.pattern.permute.xlu0 5
        %2122 = vperm.xlu0 %2121, %v286
        %v2123 = vpop.permute.xlu0 %2122
        %2125 = vset.pattern.permute.xlu0 5
        %2126 = vperm.xlu0 %2125, %v287
        %v2127 = vpop.permute.xlu0 %2126
        %2129 = vset.pattern.permute.xlu0 5
        %2130 = vperm.xlu0 %2129, %v288
        %v2131 = vpop.permute.xlu0 %2130
        %2133 = vset.pattern.permute.xlu0 5
        %2134 = vperm.xlu0 %2133, %v289
        %v2135 = vpop.permute.xlu0 %2134
        %2137 = vset.pattern.permute.xlu0 5
        %2138 = vperm.xlu0 %2137, %v290
        %v2139 = vpop.permute.xlu0 %2138
        %v2141 = vmul.f32 %v679, %v2095
        %v2142 = vmul.f32 %v680, %v2095
        %v2143 = vmul.f32 %v681, %v2095
        %v2144 = vmul.f32 %v682, %v2099
        %v2145 = vmul.f32 %v683, %v2099
        %v2146 = vmul.f32 %v684, %v2099
        %v2147 = vmul.f32 %v685, %v2103
        %v2148 = vmul.f32 %v686, %v2103
        %v2149 = vmul.f32 %v687, %v2103
        %v2150 = vmul.f32 %v688, %v2107
        %v2151 = vmul.f32 %v689, %v2107
        %v2152 = vmul.f32 %v690, %v2107
        %v2153 = vmul.f32 %v691, %v2111
        %v2154 = vmul.f32 %v692, %v2111
        %v2155 = vmul.f32 %v693, %v2111
        %v2156 = vmul.f32 %v694, %v2115
        %v2157 = vmul.f32 %v695, %v2115
        %v2158 = vmul.f32 %v696, %v2115
        %v2159 = vmul.f32 %v697, %v2119
        %v2160 = vmul.f32 %v698, %v2119
        %v2161 = vmul.f32 %v699, %v2119
        %v2162 = vmul.f32 %v700, %v2123
        %v2163 = vmul.f32 %v701, %v2123
        %v2164 = vmul.f32 %v702, %v2123
        %v2165 = vmul.f32 %v703, %v2127
        %v2166 = vmul.f32 %v704, %v2127
        %v2167 = vmul.f32 %v705, %v2127
        %v2168 = vmul.f32 %v706, %v2131
        %v2169 = vmul.f32 %v707, %v2131
        %v2170 = vmul.f32 %v708, %v2131
        %v2171 = vmul.f32 %v709, %v2135
        %v2172 = vmul.f32 %v710, %v2135
        %v2173 = vmul.f32 %v711, %v2135
        %v2174 = vmul.f32 %v712, %v2139
        %v2175 = vmul.f32 %v713, %v2139
        %v2176 = vmul.f32 %v714, %v2139
        %2213 = vrot.lane.b32.xlu0 %v2141, 112
        %v2214 = vpop.permute.xlu0 %2213
        %2215 = vrot.lane.b32.xlu0 %v2142, 112
        %v2216 = vpop.permute.xlu0 %2215
        %2217 = vrot.lane.b32.xlu0 %v2143, 112
        %v2218 = vpop.permute.xlu0 %2217
        %2219 = vrot.lane.b32.xlu0 %v2144, 112
        %v2220 = vpop.permute.xlu0 %2219
        %2221 = vrot.lane.b32.xlu0 %v2145, 112
        %v2222 = vpop.permute.xlu0 %2221
        %2223 = vrot.lane.b32.xlu0 %v2146, 112
        %v2224 = vpop.permute.xlu0 %2223
        %2225 = vrot.lane.b32.xlu0 %v2147, 112
        %v2226 = vpop.permute.xlu0 %2225
        %2227 = vrot.lane.b32.xlu0 %v2148, 112
        %v2228 = vpop.permute.xlu0 %2227
        %2229 = vrot.lane.b32.xlu0 %v2149, 112
        %v2230 = vpop.permute.xlu0 %2229
        %2231 = vrot.lane.b32.xlu0 %v2150, 112
        %v2232 = vpop.permute.xlu0 %2231
        %2233 = vrot.lane.b32.xlu0 %v2151, 112
        %v2234 = vpop.permute.xlu0 %2233
        %2235 = vrot.lane.b32.xlu0 %v2152, 112
        %v2236 = vpop.permute.xlu0 %2235
        %2237 = vrot.lane.b32.xlu0 %v2153, 112
        %v2238 = vpop.permute.xlu0 %2237
        %2239 = vrot.lane.b32.xlu0 %v2154, 112
        %v2240 = vpop.permute.xlu0 %2239
        %2241 = vrot.lane.b32.xlu0 %v2155, 112
        %v2242 = vpop.permute.xlu0 %2241
        %2243 = vrot.lane.b32.xlu0 %v2156, 112
        %v2244 = vpop.permute.xlu0 %2243
        %2245 = vrot.lane.b32.xlu0 %v2157, 112
        %v2246 = vpop.permute.xlu0 %2245
        %2247 = vrot.lane.b32.xlu0 %v2158, 112
        %v2248 = vpop.permute.xlu0 %2247
        %2249 = vrot.lane.b32.xlu0 %v2159, 112
        %v2250 = vpop.permute.xlu0 %2249
        %2251 = vrot.lane.b32.xlu0 %v2160, 112
        %v2252 = vpop.permute.xlu0 %2251
        %2253 = vrot.lane.b32.xlu0 %v2161, 112
        %v2254 = vpop.permute.xlu0 %2253
        %2255 = vrot.lane.b32.xlu0 %v2162, 112
        %v2256 = vpop.permute.xlu0 %2255
        %2257 = vrot.lane.b32.xlu0 %v2163, 112
        %v2258 = vpop.permute.xlu0 %2257
        %2259 = vrot.lane.b32.xlu0 %v2164, 112
        %v2260 = vpop.permute.xlu0 %2259
        %2261 = vrot.lane.b32.xlu0 %v2165, 112
        %v2262 = vpop.permute.xlu0 %2261
        %2263 = vrot.lane.b32.xlu0 %v2166, 112
        %v2264 = vpop.permute.xlu0 %2263
        %2265 = vrot.lane.b32.xlu0 %v2167, 112
        %v2266 = vpop.permute.xlu0 %2265
        %2267 = vrot.lane.b32.xlu0 %v2168, 112
        %v2268 = vpop.permute.xlu0 %2267
        %2269 = vrot.lane.b32.xlu0 %v2169, 112
        %v2270 = vpop.permute.xlu0 %2269
        %2271 = vrot.lane.b32.xlu0 %v2170, 112
        %v2272 = vpop.permute.xlu0 %2271
        %2273 = vrot.lane.b32.xlu0 %v2171, 112
        %v2274 = vpop.permute.xlu0 %2273
        %2275 = vrot.lane.b32.xlu0 %v2172, 112
        %v2276 = vpop.permute.xlu0 %2275
        %2277 = vrot.lane.b32.xlu0 %v2173, 112
        %v2278 = vpop.permute.xlu0 %2277
        %2279 = vrot.lane.b32.xlu0 %v2174, 112
        %v2280 = vpop.permute.xlu0 %2279
        %2281 = vrot.lane.b32.xlu0 %v2175, 112
        %v2282 = vpop.permute.xlu0 %2281
        %2283 = vrot.lane.b32.xlu0 %v2176, 112
        %v2284 = vpop.permute.xlu0 %2283
        %v2285 = vsel %vm594, %v2214, %v2216
        %v2286 = vsel %vm594, %v2216, %v2218
        %v2287 = vsel %vm594, %v2220, %v2222
        %v2288 = vsel %vm594, %v2222, %v2224
        %v2289 = vsel %vm594, %v2226, %v2228
        %v2290 = vsel %vm594, %v2228, %v2230
        %v2291 = vsel %vm594, %v2232, %v2234
        %v2292 = vsel %vm594, %v2234, %v2236
        %v2293 = vsel %vm594, %v2238, %v2240
        %v2294 = vsel %vm594, %v2240, %v2242
        %v2295 = vsel %vm594, %v2244, %v2246
        %v2296 = vsel %vm594, %v2246, %v2248
        %v2297 = vsel %vm594, %v2250, %v2252
        %v2298 = vsel %vm594, %v2252, %v2254
        %v2299 = vsel %vm594, %v2256, %v2258
        %v2300 = vsel %vm594, %v2258, %v2260
        %v2301 = vsel %vm594, %v2262, %v2264
        %v2302 = vsel %vm594, %v2264, %v2266
        %v2303 = vsel %vm594, %v2268, %v2270
        %v2304 = vsel %vm594, %v2270, %v2272
        %v2305 = vsel %vm594, %v2274, %v2276
        %v2306 = vsel %vm594, %v2276, %v2278
        %v2307 = vsel %vm594, %v2280, %v2282
        %v2308 = vsel %vm594, %v2282, %v2284
        %v2345 = vadd.f32 %v2057, %v2214
        %v2346 = vadd.f32 %v2058, %v2285
        %v2347 = vadd.f32 %v2059, %v2286
        %v2348 = vadd.f32 %v2060, %v2220
        %v2349 = vadd.f32 %v2061, %v2287
        %v2350 = vadd.f32 %v2062, %v2288
        %v2351 = vadd.f32 %v2063, %v2226
        %v2352 = vadd.f32 %v2064, %v2289
        %v2353 = vadd.f32 %v2065, %v2290
        %v2354 = vadd.f32 %v2066, %v2232
        %v2355 = vadd.f32 %v2067, %v2291
        %v2356 = vadd.f32 %v2068, %v2292
        %v2357 = vadd.f32 %v2069, %v2238
        %v2358 = vadd.f32 %v2070, %v2293
        %v2359 = vadd.f32 %v2071, %v2294
        %v2360 = vadd.f32 %v2072, %v2244
        %v2361 = vadd.f32 %v2073, %v2295
        %v2362 = vadd.f32 %v2074, %v2296
        %v2363 = vadd.f32 %v2075, %v2250
        %v2364 = vadd.f32 %v2076, %v2297
        %v2365 = vadd.f32 %v2077, %v2298
        %v2366 = vadd.f32 %v2078, %v2256
        %v2367 = vadd.f32 %v2079, %v2299
        %v2368 = vadd.f32 %v2080, %v2300
        %v2369 = vadd.f32 %v2081, %v2262
        %v2370 = vadd.f32 %v2082, %v2301
        %v2371 = vadd.f32 %v2083, %v2302
        %v2372 = vadd.f32 %v2084, %v2268
        %v2373 = vadd.f32 %v2085, %v2303
        %v2374 = vadd.f32 %v2086, %v2304
        %v2375 = vadd.f32 %v2087, %v2274
        %v2376 = vadd.f32 %v2088, %v2305
        %v2377 = vadd.f32 %v2089, %v2306
        %v2378 = vadd.f32 %v2090, %v2280
        %v2379 = vadd.f32 %v2091, %v2307
        %v2380 = vadd.f32 %v2092, %v2308
        %2381 = vset.pattern.permute.xlu0 8
        %2382 = vperm.xlu0 %2381, %v279
        %v2383 = vpop.permute.xlu0 %2382
        %2385 = vset.pattern.permute.xlu0 8
        %2386 = vperm.xlu0 %2385, %v280
        %v2387 = vpop.permute.xlu0 %2386
        %2389 = vset.pattern.permute.xlu0 8
        %2390 = vperm.xlu0 %2389, %v281
        %v2391 = vpop.permute.xlu0 %2390
        %2393 = vset.pattern.permute.xlu0 8
        %2394 = vperm.xlu0 %2393, %v282
        %v2395 = vpop.permute.xlu0 %2394
        %2397 = vset.pattern.permute.xlu0 8
        %2398 = vperm.xlu0 %2397, %v283
        %v2399 = vpop.permute.xlu0 %2398
        %2401 = vset.pattern.permute.xlu0 8
        %2402 = vperm.xlu0 %2401, %v284
        %v2403 = vpop.permute.xlu0 %2402
        %2405 = vset.pattern.permute.xlu0 8
        %2406 = vperm.xlu0 %2405, %v285
        %v2407 = vpop.permute.xlu0 %2406
        %2409 = vset.pattern.permute.xlu0 8
        %2410 = vperm.xlu0 %2409, %v286
        %v2411 = vpop.permute.xlu0 %2410
        %2413 = vset.pattern.permute.xlu0 8
        %2414 = vperm.xlu0 %2413, %v287
        %v2415 = vpop.permute.xlu0 %2414
        %2417 = vset.pattern.permute.xlu0 8
        %2418 = vperm.xlu0 %2417, %v288
        %v2419 = vpop.permute.xlu0 %2418
        %2421 = vset.pattern.permute.xlu0 8
        %2422 = vperm.xlu0 %2421, %v289
        %v2423 = vpop.permute.xlu0 %2422
        %2425 = vset.pattern.permute.xlu0 8
        %2426 = vperm.xlu0 %2425, %v290
        %v2427 = vpop.permute.xlu0 %2426
        %v2429 = vmul.f32 %v679, %v2383
        %v2430 = vmul.f32 %v680, %v2383
        %v2431 = vmul.f32 %v681, %v2383
        %v2432 = vmul.f32 %v682, %v2387
        %v2433 = vmul.f32 %v683, %v2387
        %v2434 = vmul.f32 %v684, %v2387
        %v2435 = vmul.f32 %v685, %v2391
        %v2436 = vmul.f32 %v686, %v2391
        %v2437 = vmul.f32 %v687, %v2391
        %v2438 = vmul.f32 %v688, %v2395
        %v2439 = vmul.f32 %v689, %v2395
        %v2440 = vmul.f32 %v690, %v2395
        %v2441 = vmul.f32 %v691, %v2399
        %v2442 = vmul.f32 %v692, %v2399
        %v2443 = vmul.f32 %v693, %v2399
        %v2444 = vmul.f32 %v694, %v2403
        %v2445 = vmul.f32 %v695, %v2403
        %v2446 = vmul.f32 %v696, %v2403
        %v2447 = vmul.f32 %v697, %v2407
        %v2448 = vmul.f32 %v698, %v2407
        %v2449 = vmul.f32 %v699, %v2407
        %v2450 = vmul.f32 %v700, %v2411
        %v2451 = vmul.f32 %v701, %v2411
        %v2452 = vmul.f32 %v702, %v2411
        %v2453 = vmul.f32 %v703, %v2415
        %v2454 = vmul.f32 %v704, %v2415
        %v2455 = vmul.f32 %v705, %v2415
        %v2456 = vmul.f32 %v706, %v2419
        %v2457 = vmul.f32 %v707, %v2419
        %v2458 = vmul.f32 %v708, %v2419
        %v2459 = vmul.f32 %v709, %v2423
        %v2460 = vmul.f32 %v710, %v2423
        %v2461 = vmul.f32 %v711, %v2423
        %v2462 = vmul.f32 %v712, %v2427
        %v2463 = vmul.f32 %v713, %v2427
        %v2464 = vmul.f32 %v714, %v2427
        %2501 = vrot.lane.b32.xlu0 %v2429, 96
        %v2502 = vpop.permute.xlu0 %2501
        %2503 = vrot.lane.b32.xlu0 %v2430, 96
        %v2504 = vpop.permute.xlu0 %2503
        %2505 = vrot.lane.b32.xlu0 %v2431, 96
        %v2506 = vpop.permute.xlu0 %2505
        %2507 = vrot.lane.b32.xlu0 %v2432, 96
        %v2508 = vpop.permute.xlu0 %2507
        %2509 = vrot.lane.b32.xlu0 %v2433, 96
        %v2510 = vpop.permute.xlu0 %2509
        %2511 = vrot.lane.b32.xlu0 %v2434, 96
        %v2512 = vpop.permute.xlu0 %2511
        %2513 = vrot.lane.b32.xlu0 %v2435, 96
        %v2514 = vpop.permute.xlu0 %2513
        %2515 = vrot.lane.b32.xlu0 %v2436, 96
        %v2516 = vpop.permute.xlu0 %2515
        %2517 = vrot.lane.b32.xlu0 %v2437, 96
        %v2518 = vpop.permute.xlu0 %2517
        %2519 = vrot.lane.b32.xlu0 %v2438, 96
        %v2520 = vpop.permute.xlu0 %2519
        %2521 = vrot.lane.b32.xlu0 %v2439, 96
        %v2522 = vpop.permute.xlu0 %2521
        %2523 = vrot.lane.b32.xlu0 %v2440, 96
        %v2524 = vpop.permute.xlu0 %2523
        %2525 = vrot.lane.b32.xlu0 %v2441, 96
        %v2526 = vpop.permute.xlu0 %2525
        %2527 = vrot.lane.b32.xlu0 %v2442, 96
        %v2528 = vpop.permute.xlu0 %2527
        %2529 = vrot.lane.b32.xlu0 %v2443, 96
        %v2530 = vpop.permute.xlu0 %2529
        %2531 = vrot.lane.b32.xlu0 %v2444, 96
        %v2532 = vpop.permute.xlu0 %2531
        %2533 = vrot.lane.b32.xlu0 %v2445, 96
        %v2534 = vpop.permute.xlu0 %2533
        %2535 = vrot.lane.b32.xlu0 %v2446, 96
        %v2536 = vpop.permute.xlu0 %2535
        %2537 = vrot.lane.b32.xlu0 %v2447, 96
        %v2538 = vpop.permute.xlu0 %2537
        %2539 = vrot.lane.b32.xlu0 %v2448, 96
        %v2540 = vpop.permute.xlu0 %2539
        %2541 = vrot.lane.b32.xlu0 %v2449, 96
        %v2542 = vpop.permute.xlu0 %2541
        %2543 = vrot.lane.b32.xlu0 %v2450, 96
        %v2544 = vpop.permute.xlu0 %2543
        %2545 = vrot.lane.b32.xlu0 %v2451, 96
        %v2546 = vpop.permute.xlu0 %2545
        %2547 = vrot.lane.b32.xlu0 %v2452, 96
        %v2548 = vpop.permute.xlu0 %2547
        %2549 = vrot.lane.b32.xlu0 %v2453, 96
        %v2550 = vpop.permute.xlu0 %2549
        %2551 = vrot.lane.b32.xlu0 %v2454, 96
        %v2552 = vpop.permute.xlu0 %2551
        %2553 = vrot.lane.b32.xlu0 %v2455, 96
        %v2554 = vpop.permute.xlu0 %2553
        %2555 = vrot.lane.b32.xlu0 %v2456, 96
        %v2556 = vpop.permute.xlu0 %2555
        %2557 = vrot.lane.b32.xlu0 %v2457, 96
        %v2558 = vpop.permute.xlu0 %2557
        %2559 = vrot.lane.b32.xlu0 %v2458, 96
        %v2560 = vpop.permute.xlu0 %2559
        %2561 = vrot.lane.b32.xlu0 %v2459, 96
        %v2562 = vpop.permute.xlu0 %2561
        %2563 = vrot.lane.b32.xlu0 %v2460, 96
        %v2564 = vpop.permute.xlu0 %2563
        %2565 = vrot.lane.b32.xlu0 %v2461, 96
        %v2566 = vpop.permute.xlu0 %2565
        %2567 = vrot.lane.b32.xlu0 %v2462, 96
        %v2568 = vpop.permute.xlu0 %2567
        %2569 = vrot.lane.b32.xlu0 %v2463, 96
        %v2570 = vpop.permute.xlu0 %2569
        %2571 = vrot.lane.b32.xlu0 %v2464, 96
        %v2572 = vpop.permute.xlu0 %2571
        %v2573 = vsel %vm907, %v2502, %v2504
        %v2574 = vsel %vm907, %v2504, %v2506
        %v2575 = vsel %vm907, %v2508, %v2510
        %v2576 = vsel %vm907, %v2510, %v2512
        %v2577 = vsel %vm907, %v2514, %v2516
        %v2578 = vsel %vm907, %v2516, %v2518
        %v2579 = vsel %vm907, %v2520, %v2522
        %v2580 = vsel %vm907, %v2522, %v2524
        %v2581 = vsel %vm907, %v2526, %v2528
        %v2582 = vsel %vm907, %v2528, %v2530
        %v2583 = vsel %vm907, %v2532, %v2534
        %v2584 = vsel %vm907, %v2534, %v2536
        %v2585 = vsel %vm907, %v2538, %v2540
        %v2586 = vsel %vm907, %v2540, %v2542
        %v2587 = vsel %vm907, %v2544, %v2546
        %v2588 = vsel %vm907, %v2546, %v2548
        %v2589 = vsel %vm907, %v2550, %v2552
        %v2590 = vsel %vm907, %v2552, %v2554
        %v2591 = vsel %vm907, %v2556, %v2558
        %v2592 = vsel %vm907, %v2558, %v2560
        %v2593 = vsel %vm907, %v2562, %v2564
        %v2594 = vsel %vm907, %v2564, %v2566
        %v2595 = vsel %vm907, %v2568, %v2570
        %v2596 = vsel %vm907, %v2570, %v2572
        %v2633 = vadd.f32 %v2345, %v2502
        %v2634 = vadd.f32 %v2346, %v2573
        %v2635 = vadd.f32 %v2347, %v2574
        %v2636 = vadd.f32 %v2348, %v2508
        %v2637 = vadd.f32 %v2349, %v2575
        %v2638 = vadd.f32 %v2350, %v2576
        %v2639 = vadd.f32 %v2351, %v2514
        %v2640 = vadd.f32 %v2352, %v2577
        %v2641 = vadd.f32 %v2353, %v2578
        %v2642 = vadd.f32 %v2354, %v2520
        %v2643 = vadd.f32 %v2355, %v2579
        %v2644 = vadd.f32 %v2356, %v2580
        %v2645 = vadd.f32 %v2357, %v2526
        %v2646 = vadd.f32 %v2358, %v2581
        %v2647 = vadd.f32 %v2359, %v2582
        %v2648 = vadd.f32 %v2360, %v2532
        %v2649 = vadd.f32 %v2361, %v2583
        %v2650 = vadd.f32 %v2362, %v2584
        %v2651 = vadd.f32 %v2363, %v2538
        %v2652 = vadd.f32 %v2364, %v2585
        %v2653 = vadd.f32 %v2365, %v2586
        %v2654 = vadd.f32 %v2366, %v2544
        %v2655 = vadd.f32 %v2367, %v2587
        %v2656 = vadd.f32 %v2368, %v2588
        %v2657 = vadd.f32 %v2369, %v2550
        %v2658 = vadd.f32 %v2370, %v2589
        %v2659 = vadd.f32 %v2371, %v2590
        %v2660 = vadd.f32 %v2372, %v2556
        %v2661 = vadd.f32 %v2373, %v2591
        %v2662 = vadd.f32 %v2374, %v2592
        %v2663 = vadd.f32 %v2375, %v2562
        %v2664 = vadd.f32 %v2376, %v2593
        %v2665 = vadd.f32 %v2377, %v2594
        %v2666 = vadd.f32 %v2378, %v2568
        %v2667 = vadd.f32 %v2379, %v2595
        %v2668 = vadd.f32 %v2380, %v2596
        %v2669 = vsel %vm2007, 1, 0
        %v2670 = vsel %vm2008, 1, 0
        %vm2671 = vcmp.eq.s32.totalorder %v2669, 1
        %vm2672 = vcmp.eq.s32.totalorder %v2670, 1
        %2709 = vrot.lane.b32.xlu0 %v2633, 15
        %v2710 = vpop.permute.xlu0 %2709
        %2711 = vrot.lane.b32.xlu0 %v2634, 15
        %v2712 = vpop.permute.xlu0 %2711
        %2713 = vrot.lane.b32.xlu0 %v2635, 15
        %v2714 = vpop.permute.xlu0 %2713
        %2715 = vrot.lane.b32.xlu0 %v2636, 15
        %v2716 = vpop.permute.xlu0 %2715
        %2717 = vrot.lane.b32.xlu0 %v2637, 15
        %v2718 = vpop.permute.xlu0 %2717
        %2719 = vrot.lane.b32.xlu0 %v2638, 15
        %v2720 = vpop.permute.xlu0 %2719
        %2721 = vrot.lane.b32.xlu0 %v2639, 15
        %v2722 = vpop.permute.xlu0 %2721
        %2723 = vrot.lane.b32.xlu0 %v2640, 15
        %v2724 = vpop.permute.xlu0 %2723
        %2725 = vrot.lane.b32.xlu0 %v2641, 15
        %v2726 = vpop.permute.xlu0 %2725
        %2727 = vrot.lane.b32.xlu0 %v2642, 15
        %v2728 = vpop.permute.xlu0 %2727
        %2729 = vrot.lane.b32.xlu0 %v2643, 15
        %v2730 = vpop.permute.xlu0 %2729
        %2731 = vrot.lane.b32.xlu0 %v2644, 15
        %v2732 = vpop.permute.xlu0 %2731
        %2733 = vrot.lane.b32.xlu0 %v2645, 15
        %v2734 = vpop.permute.xlu0 %2733
        %2735 = vrot.lane.b32.xlu0 %v2646, 15
        %v2736 = vpop.permute.xlu0 %2735
        %2737 = vrot.lane.b32.xlu0 %v2647, 15
        %v2738 = vpop.permute.xlu0 %2737
        %2739 = vrot.lane.b32.xlu0 %v2648, 15
        %v2740 = vpop.permute.xlu0 %2739
        %2741 = vrot.lane.b32.xlu0 %v2649, 15
        %v2742 = vpop.permute.xlu0 %2741
        %2743 = vrot.lane.b32.xlu0 %v2650, 15
        %v2744 = vpop.permute.xlu0 %2743
        %2745 = vrot.lane.b32.xlu0 %v2651, 15
        %v2746 = vpop.permute.xlu0 %2745
        %2747 = vrot.lane.b32.xlu0 %v2652, 15
        %v2748 = vpop.permute.xlu0 %2747
        %2749 = vrot.lane.b32.xlu0 %v2653, 15
        %v2750 = vpop.permute.xlu0 %2749
        %2751 = vrot.lane.b32.xlu0 %v2654, 15
        %v2752 = vpop.permute.xlu0 %2751
        %2753 = vrot.lane.b32.xlu0 %v2655, 15
        %v2754 = vpop.permute.xlu0 %2753
        %2755 = vrot.lane.b32.xlu0 %v2656, 15
        %v2756 = vpop.permute.xlu0 %2755
        %2757 = vrot.lane.b32.xlu0 %v2657, 15
        %v2758 = vpop.permute.xlu0 %2757
        %2759 = vrot.lane.b32.xlu0 %v2658, 15
        %v2760 = vpop.permute.xlu0 %2759
        %2761 = vrot.lane.b32.xlu0 %v2659, 15
        %v2762 = vpop.permute.xlu0 %2761
        %2763 = vrot.lane.b32.xlu0 %v2660, 15
        %v2764 = vpop.permute.xlu0 %2763
        %2765 = vrot.lane.b32.xlu0 %v2661, 15
        %v2766 = vpop.permute.xlu0 %2765
        %2767 = vrot.lane.b32.xlu0 %v2662, 15
        %v2768 = vpop.permute.xlu0 %2767
        %2769 = vrot.lane.b32.xlu0 %v2663, 15
        %v2770 = vpop.permute.xlu0 %2769
        %2771 = vrot.lane.b32.xlu0 %v2664, 15
        %v2772 = vpop.permute.xlu0 %2771
        %2773 = vrot.lane.b32.xlu0 %v2665, 15
        %v2774 = vpop.permute.xlu0 %2773
        %2775 = vrot.lane.b32.xlu0 %v2666, 15
        %v2776 = vpop.permute.xlu0 %2775
        %2777 = vrot.lane.b32.xlu0 %v2667, 15
        %v2778 = vpop.permute.xlu0 %2777
        %2779 = vrot.lane.b32.xlu0 %v2668, 15
        %v2780 = vpop.permute.xlu0 %2779
        %vm2781 = vcmask 121856
        %v2782 = vsel %vm2781, %v2710, %v2712
        %v2783 = vsel %vm2781, %v2712, %v2714
        %v2784 = vsel %vm2781, %v2716, %v2718
        %v2785 = vsel %vm2781, %v2718, %v2720
        %v2786 = vsel %vm2781, %v2722, %v2724
        %v2787 = vsel %vm2781, %v2724, %v2726
        %v2788 = vsel %vm2781, %v2728, %v2730
        %v2789 = vsel %vm2781, %v2730, %v2732
        %v2790 = vsel %vm2781, %v2734, %v2736
        %v2791 = vsel %vm2781, %v2736, %v2738
        %v2792 = vsel %vm2781, %v2740, %v2742
        %v2793 = vsel %vm2781, %v2742, %v2744
        %v2794 = vsel %vm2781, %v2746, %v2748
        %v2795 = vsel %vm2781, %v2748, %v2750
        %v2796 = vsel %vm2781, %v2752, %v2754
        %v2797 = vsel %vm2781, %v2754, %v2756
        %v2798 = vsel %vm2781, %v2758, %v2760
        %v2799 = vsel %vm2781, %v2760, %v2762
        %v2800 = vsel %vm2781, %v2764, %v2766
        %v2801 = vsel %vm2781, %v2766, %v2768
        %v2802 = vsel %vm2781, %v2770, %v2772
        %v2803 = vsel %vm2781, %v2772, %v2774
        %v2804 = vsel %vm2781, %v2776, %v2778
        %v2805 = vsel %vm2781, %v2778, %v2780
        %v2830 = vsel %vm2671, %v2782, 0.0
        %v2831 = vsel %vm2672, %v2783, 0.0
        %v2832 = vsel %vm2671, %v2784, 0.0
        %v2833 = vsel %vm2672, %v2785, 0.0
        %v2834 = vsel %vm2671, %v2786, 0.0
        %v2835 = vsel %vm2672, %v2787, 0.0
        %v2836 = vsel %vm2671, %v2788, 0.0
        %v2837 = vsel %vm2672, %v2789, 0.0
        %v2838 = vsel %vm2671, %v2790, 0.0
        %v2839 = vsel %vm2672, %v2791, 0.0
        %v2840 = vsel %vm2671, %v2792, 0.0
        %v2841 = vsel %vm2672, %v2793, 0.0
        %v2842 = vsel %vm2671, %v2794, 0.0
        %v2843 = vsel %vm2672, %v2795, 0.0
        %v2844 = vsel %vm2671, %v2796, 0.0
        %v2845 = vsel %vm2672, %v2797, 0.0
        %v2846 = vsel %vm2671, %v2798, 0.0
        %v2847 = vsel %vm2672, %v2799, 0.0
        %v2848 = vsel %vm2671, %v2800, 0.0
        %v2849 = vsel %vm2672, %v2801, 0.0
        %v2850 = vsel %vm2671, %v2802, 0.0
        %v2851 = vsel %vm2672, %v2803, 0.0
        %v2852 = vsel %vm2671, %v2804, 0.0
        %v2853 = vsel %vm2672, %v2805, 0.0
        %2878 = vrot.lane.b32.xlu0 %v2830, 112
        %v2879 = vpop.permute.xlu0 %2878
        %2880 = vrot.lane.b32.xlu0 %v2831, 112
        %v2881 = vpop.permute.xlu0 %2880
        %2882 = vrot.lane.b32.xlu0 %v2832, 112
        %v2883 = vpop.permute.xlu0 %2882
        %2884 = vrot.lane.b32.xlu0 %v2833, 112
        %v2885 = vpop.permute.xlu0 %2884
        %2886 = vrot.lane.b32.xlu0 %v2834, 112
        %v2887 = vpop.permute.xlu0 %2886
        %2888 = vrot.lane.b32.xlu0 %v2835, 112
        %v2889 = vpop.permute.xlu0 %2888
        %2890 = vrot.lane.b32.xlu0 %v2836, 112
        %v2891 = vpop.permute.xlu0 %2890
        %2892 = vrot.lane.b32.xlu0 %v2837, 112
        %v2893 = vpop.permute.xlu0 %2892
        %2894 = vrot.lane.b32.xlu0 %v2838, 112
        %v2895 = vpop.permute.xlu0 %2894
        %2896 = vrot.lane.b32.xlu0 %v2839, 112
        %v2897 = vpop.permute.xlu0 %2896
        %2898 = vrot.lane.b32.xlu0 %v2840, 112
        %v2899 = vpop.permute.xlu0 %2898
        %2900 = vrot.lane.b32.xlu0 %v2841, 112
        %v2901 = vpop.permute.xlu0 %2900
        %2902 = vrot.lane.b32.xlu0 %v2842, 112
        %v2903 = vpop.permute.xlu0 %2902
        %2904 = vrot.lane.b32.xlu0 %v2843, 112
        %v2905 = vpop.permute.xlu0 %2904
        %2906 = vrot.lane.b32.xlu0 %v2844, 112
        %v2907 = vpop.permute.xlu0 %2906
        %2908 = vrot.lane.b32.xlu0 %v2845, 112
        %v2909 = vpop.permute.xlu0 %2908
        %2910 = vrot.lane.b32.xlu0 %v2846, 112
        %v2911 = vpop.permute.xlu0 %2910
        %2912 = vrot.lane.b32.xlu0 %v2847, 112
        %v2913 = vpop.permute.xlu0 %2912
        %2914 = vrot.lane.b32.xlu0 %v2848, 112
        %v2915 = vpop.permute.xlu0 %2914
        %2916 = vrot.lane.b32.xlu0 %v2849, 112
        %v2917 = vpop.permute.xlu0 %2916
        %2918 = vrot.lane.b32.xlu0 %v2850, 112
        %v2919 = vpop.permute.xlu0 %2918
        %2920 = vrot.lane.b32.xlu0 %v2851, 112
        %v2921 = vpop.permute.xlu0 %2920
        %2922 = vrot.lane.b32.xlu0 %v2852, 112
        %v2923 = vpop.permute.xlu0 %2922
        %2924 = vrot.lane.b32.xlu0 %v2853, 112
        %v2925 = vpop.permute.xlu0 %2924
        %v2926 = vsel %vm594, %v2879, %v2881
        %v2927 = vsel %vm594, %v2883, %v2885
        %v2928 = vsel %vm594, %v2887, %v2889
        %v2929 = vsel %vm594, %v2891, %v2893
        %v2930 = vsel %vm594, %v2895, %v2897
        %v2931 = vsel %vm594, %v2899, %v2901
        %v2932 = vsel %vm594, %v2903, %v2905
        %v2933 = vsel %vm594, %v2907, %v2909
        %v2934 = vsel %vm594, %v2911, %v2913
        %v2935 = vsel %vm594, %v2915, %v2917
        %v2936 = vsel %vm594, %v2919, %v2921
        %v2937 = vsel %vm594, %v2923, %v2925
        %v2974 = vadd.f32 %v1971, %v2879
        %v2975 = vadd.f32 %v1972, %v2926
        %v2976 = vadd.f32 %v1973, %v2881
        %v2977 = vadd.f32 %v1974, %v2883
        %v2978 = vadd.f32 %v1975, %v2927
        %v2979 = vadd.f32 %v1976, %v2885
        %v2980 = vadd.f32 %v1977, %v2887
        %v2981 = vadd.f32 %v1978, %v2928
        %v2982 = vadd.f32 %v1979, %v2889
        %v2983 = vadd.f32 %v1980, %v2891
        %v2984 = vadd.f32 %v1981, %v2929
        %v2985 = vadd.f32 %v1982, %v2893
        %v2986 = vadd.f32 %v1983, %v2895
        %v2987 = vadd.f32 %v1984, %v2930
        %v2988 = vadd.f32 %v1985, %v2897
        %v2989 = vadd.f32 %v1986, %v2899
        %v2990 = vadd.f32 %v1987, %v2931
        %v2991 = vadd.f32 %v1988, %v2901
        %v2992 = vadd.f32 %v1989, %v2903
        %v2993 = vadd.f32 %v1990, %v2932
        %v2994 = vadd.f32 %v1991, %v2905
        %v2995 = vadd.f32 %v1992, %v2907
        %v2996 = vadd.f32 %v1993, %v2933
        %v2997 = vadd.f32 %v1994, %v2909
        %v2998 = vadd.f32 %v1995, %v2911
        %v2999 = vadd.f32 %v1996, %v2934
        %v3000 = vadd.f32 %v1997, %v2913
        %v3001 = vadd.f32 %v1998, %v2915
        %v3002 = vadd.f32 %v1999, %v2935
        %v3003 = vadd.f32 %v2000, %v2917
        %v3004 = vadd.f32 %v2001, %v2919
        %v3005 = vadd.f32 %v2002, %v2936
        %v3006 = vadd.f32 %v2003, %v2921
        %v3007 = vadd.f32 %v2004, %v2923
        %v3008 = vadd.f32 %v2005, %v2937
        %v3009 = vadd.f32 %v2006, %v2925
        %3046 = vrot.lane.b32.xlu0 %v2974, 16
        %v3047 = vpop.permute.xlu0 %3046
        %3048 = vrot.lane.b32.xlu0 %v2975, 16
        %v3049 = vpop.permute.xlu0 %3048
        %3050 = vrot.lane.b32.xlu0 %v2976, 16
        %v3051 = vpop.permute.xlu0 %3050
        %3052 = vrot.lane.b32.xlu0 %v2977, 16
        %v3053 = vpop.permute.xlu0 %3052
        %3054 = vrot.lane.b32.xlu0 %v2978, 16
        %v3055 = vpop.permute.xlu0 %3054
        %3056 = vrot.lane.b32.xlu0 %v2979, 16
        %v3057 = vpop.permute.xlu0 %3056
        %3058 = vrot.lane.b32.xlu0 %v2980, 16
        %v3059 = vpop.permute.xlu0 %3058
        %3060 = vrot.lane.b32.xlu0 %v2981, 16
        %v3061 = vpop.permute.xlu0 %3060
        %3062 = vrot.lane.b32.xlu0 %v2982, 16
        %v3063 = vpop.permute.xlu0 %3062
        %3064 = vrot.lane.b32.xlu0 %v2983, 16
        %v3065 = vpop.permute.xlu0 %3064
        %3066 = vrot.lane.b32.xlu0 %v2984, 16
        %v3067 = vpop.permute.xlu0 %3066
        %3068 = vrot.lane.b32.xlu0 %v2985, 16
        %v3069 = vpop.permute.xlu0 %3068
        %3070 = vrot.lane.b32.xlu0 %v2986, 16
        %v3071 = vpop.permute.xlu0 %3070
        %3072 = vrot.lane.b32.xlu0 %v2987, 16
        %v3073 = vpop.permute.xlu0 %3072
        %3074 = vrot.lane.b32.xlu0 %v2988, 16
        %v3075 = vpop.permute.xlu0 %3074
        %3076 = vrot.lane.b32.xlu0 %v2989, 16
        %v3077 = vpop.permute.xlu0 %3076
        %3078 = vrot.lane.b32.xlu0 %v2990, 16
        %v3079 = vpop.permute.xlu0 %3078
        %3080 = vrot.lane.b32.xlu0 %v2991, 16
        %v3081 = vpop.permute.xlu0 %3080
        %3082 = vrot.lane.b32.xlu0 %v2992, 16
        %v3083 = vpop.permute.xlu0 %3082
        %3084 = vrot.lane.b32.xlu0 %v2993, 16
        %v3085 = vpop.permute.xlu0 %3084
        %3086 = vrot.lane.b32.xlu0 %v2994, 16
        %v3087 = vpop.permute.xlu0 %3086
        %3088 = vrot.lane.b32.xlu0 %v2995, 16
        %v3089 = vpop.permute.xlu0 %3088
        %3090 = vrot.lane.b32.xlu0 %v2996, 16
        %v3091 = vpop.permute.xlu0 %3090
        %3092 = vrot.lane.b32.xlu0 %v2997, 16
        %v3093 = vpop.permute.xlu0 %3092
        %3094 = vrot.lane.b32.xlu0 %v2998, 16
        %v3095 = vpop.permute.xlu0 %3094
        %3096 = vrot.lane.b32.xlu0 %v2999, 16
        %v3097 = vpop.permute.xlu0 %3096
        %3098 = vrot.lane.b32.xlu0 %v3000, 16
        %v3099 = vpop.permute.xlu0 %3098
        %3100 = vrot.lane.b32.xlu0 %v3001, 16
        %v3101 = vpop.permute.xlu0 %3100
        %3102 = vrot.lane.b32.xlu0 %v3002, 16
        %v3103 = vpop.permute.xlu0 %3102
        %3104 = vrot.lane.b32.xlu0 %v3003, 16
        %v3105 = vpop.permute.xlu0 %3104
        %3106 = vrot.lane.b32.xlu0 %v3004, 16
        %v3107 = vpop.permute.xlu0 %3106
        %3108 = vrot.lane.b32.xlu0 %v3005, 16
        %v3109 = vpop.permute.xlu0 %3108
        %3110 = vrot.lane.b32.xlu0 %v3006, 16
        %v3111 = vpop.permute.xlu0 %3110
        %3112 = vrot.lane.b32.xlu0 %v3007, 16
        %v3113 = vpop.permute.xlu0 %3112
        %3114 = vrot.lane.b32.xlu0 %v3008, 16
        %v3115 = vpop.permute.xlu0 %3114
        %3116 = vrot.lane.b32.xlu0 %v3009, 16
        %v3117 = vpop.permute.xlu0 %3116
        %vm3118 = vcmask 130048
        %v3119 = vsel %vm3118, %v3047, %v3049
        %v3120 = vsel %vm3118, %v3049, %v3051
        %v3121 = vsel %vm3118, %v3053, %v3055
        %v3122 = vsel %vm3118, %v3055, %v3057
        %v3123 = vsel %vm3118, %v3059, %v3061
        %v3124 = vsel %vm3118, %v3061, %v3063
        %v3125 = vsel %vm3118, %v3065, %v3067
        %v3126 = vsel %vm3118, %v3067, %v3069
        %v3127 = vsel %vm3118, %v3071, %v3073
        %v3128 = vsel %vm3118, %v3073, %v3075
        %v3129 = vsel %vm3118, %v3077, %v3079
        %v3130 = vsel %vm3118, %v3079, %v3081
        %v3131 = vsel %vm3118, %v3083, %v3085
        %v3132 = vsel %vm3118, %v3085, %v3087
        %v3133 = vsel %vm3118, %v3089, %v3091
        %v3134 = vsel %vm3118, %v3091, %v3093
        %v3135 = vsel %vm3118, %v3095, %v3097
        %v3136 = vsel %vm3118, %v3097, %v3099
        %v3137 = vsel %vm3118, %v3101, %v3103
        %v3138 = vsel %vm3118, %v3103, %v3105
        %v3139 = vsel %vm3118, %v3107, %v3109
        %v3140 = vsel %vm3118, %v3109, %v3111
        %v3141 = vsel %vm3118, %v3113, %v3115
        %v3142 = vsel %vm3118, %v3115, %v3117
        %3167 = vst [vmem:[%s198] sm:$0xff] %v3119
        %3168 = vst [vmem:[%s198 + $0x8] sm:$0xff] %v3120
        %3169 = vst [vmem:[%s198 + $0x10] sm:$0xff] %v3121
        %3170 = vst [vmem:[%s198 + $0x18] sm:$0xff] %v3122
        %3171 = vst [vmem:[%s198 + $0x20] sm:$0xff] %v3123
        %3172 = vst [vmem:[%s198 + $0x28] sm:$0xff] %v3124
        %3173 = vst [vmem:[%s198 + $0x30] sm:$0xff] %v3125
        %3174 = vst [vmem:[%s198 + $0x38] sm:$0xff] %v3126
        %3175 = vst [vmem:[%s198 + $0x40] sm:$0xff] %v3127
        %3176 = vst [vmem:[%s198 + $0x48] sm:$0xff] %v3128
        %3177 = vst [vmem:[%s198 + $0x50] sm:$0xff] %v3129
        %3178 = vst [vmem:[%s198 + $0x58] sm:$0xff] %v3130
        %3179 = vst [vmem:[%s198 + $0x60] sm:$0xff] %v3131
        %3180 = vst [vmem:[%s198 + $0x68] sm:$0xff] %v3132
        %3181 = vst [vmem:[%s198 + $0x70] sm:$0xff] %v3133
        %3182 = vst [vmem:[%s198 + $0x78] sm:$0xff] %v3134
        %3183 = vst [vmem:[%s198 + $0x80] sm:$0xff] %v3135
        %3184 = vst [vmem:[%s198 + $0x88] sm:$0xff] %v3136
        %3185 = vst [vmem:[%s198 + $0x90] sm:$0xff] %v3137
        %3186 = vst [vmem:[%s198 + $0x98] sm:$0xff] %v3138
        %3187 = vst [vmem:[%s198 + $0xa0] sm:$0xff] %v3139
        %3188 = vst [vmem:[%s198 + $0xa8] sm:$0xff] %v3140
        %3189 = vst [vmem:[%s198 + $0xb0] sm:$0xff] %v3141
        %3190 = vst [vmem:[%s198 + $0xb8] sm:$0xff] %v3142
        %s3191 = sand.u32 %s95, 1
        %s3192 = scalar_lea.sflag [#allocation5], %s3191
        %s3193 = sand.u32 %s95, 1
        %s3194 = smul.addr %s3193, 192
        %s3195 = scalar_lea.vmem [#allocation6], %s3194
        // Predicated region
        $region33: #{tpu_custom_call.1} parent=27 // pred_check
          %p3196 = pneg %p105
        $region34: #{tpu_custom_call.1} parent=27 // pred_check_branch
          %3198 = sbr.rel (%p3196) target = $region36
        $region35: #{tpu_custom_call.1} parent=27 // pred_region
          %s3199 = smul.u32 12, %s24
          %3201 = vsyncadd %s3192, 0
          %s3202 = smul.addr %s3199, 2
          %s3203 = smul.addr %s23, 48
          %s3204 = sadd.s32 %s3202, %s3203
          %s3205 = smul.addr %s3204, 8
          %s3206 = scalar_lea.hbm %s2, %s3205
          %s3207 = sshll.u32 %s3195, 4
          %s3208 = int_to_ptr.vmem [resolvable:$true] %s3207
          %s3209 = sshll.u32 %s3206, 4
          %s3210 = int_to_ptr.hbm [resolvable:$true] %s3209
          %3215 = dma.vmem_to_hbm [thread:$0]  %s3208, 3072, %s3210, %s3192, 256, 256, 16
        $region36: #{tpu_custom_call.1} parent=27 // pred_fallthru
          _
      $region28: #{tpu_custom_call.1} parent=5 // pred_fallthru
        _
      %p3216 = scmp.le.s32.totalorder 2, %s14
      // Predicated region
      $region37: #{tpu_custom_call.1} parent=5 // pred_check
        %p3217 = pneg %p3216
      $region38: #{tpu_custom_call.1} parent=5 // pred_check_branch
        %3219 = sbr.rel (%p3217) target = $region40
      $region39: #{tpu_custom_call.1} parent=5 // pred_region
        %s3220 = ssub.s32 %s14, 2
        // Predicated region
        $region41: #{tpu_custom_call.1} parent=39 // pred_check
          %p3221 = pneg %p111
        $region42: #{tpu_custom_call.1} parent=39 // pred_check_branch
          %3223 = sbr.rel (%p3221) target = $region44
        $region43: #{tpu_custom_call.1} parent=39 // pred_region
          %s3224 = sand.u32 %s96, 1
          %s3225 = scalar_lea.sflag [#allocation5], %s3224
          %s3226 = sand.u32 %s96, 1
          %s3227 = smul.addr %s3226, 192
          %s3228 = scalar_lea.vmem [#allocation6], %s3227
          %3230 = dma.done %s3225, 3072
        $region44: #{tpu_custom_call.1} parent=39 // pred_fallthru
          _
      $region40: #{tpu_custom_call.1} parent=5 // pred_fallthru
        _
    $region6: #{tpu_custom_call.1} parent=1 // loop_footer
      %s18 = sadd.s32 1, %s14
    $region7: #{tpu_custom_call.1} parent=1 // loop_footer_branch
      %13 = sbr.rel target = $region3
    $region8: #{tpu_custom_call.1} parent=1 // loop_exit
      _
    %3231 = vsyncpa [#allocation4], 1
    %s3232 = scalar_lea.sflag [#allocation4], 1
    %3233 = vsyncpa %s3232, 1
    %3234 = vsyncpa [#allocation5], 1
    %s3235 = scalar_lea.sflag [#allocation5], 1
    %3236 = vsyncpa %s3235, 1

</llo_original>
